<compile_context>
chip_gen: v5e
topology: v5e:2x2
jax: 0.10.0
libtpu: 0.0.40
codegen_flags: <defaults>
</compile_context>

<pallas_src>
import functools

import jax
import jax.numpy as jnp
from jax.experimental import pallas as pl
from jax.experimental.pallas import tpu as pltpu


def _round_up(x, m):
    return ((x + m - 1) // m) * m


def _pow2_divisor(n):
    return n & (-n)


def _pick_vmem_limit_bytes():
    """Generation-dependent scoped-VMEM limit: ~80% of physical, capped at 112 MiB.
    v5e/v6e (128 MiB) -> ~102 MiB; v7x (64 MiB) -> ~51 MiB."""
    cap = None
    try:
        cap = getattr(pltpu.get_tpu_info(), "vmem_capacity_bytes", None)
    except Exception:
        cap = None
    if not cap or cap <= 0:
        cap = 64 * 1024 * 1024
    return int(min(cap * 4 // 5, 112 * 1024 * 1024))


# ----------------------------------------------------------------------------
# Fused kernel: 2x GraphSAGE('mean') + ReLU + computeSim epilogue.
# grid = (pass in {pos, neg}, layer in {0, 1}, dst-row tile)
# ----------------------------------------------------------------------------
def _gnn_kernel(a_ref, h0_ref, invdeg_ref, w_ref, b_ref, loss_ref,
                h_in_s, h_out_s, *, Bp, S, Dp, TM):
    layer = pl.program_id(1)
    tile = pl.program_id(2)
    n_tiles = pl.num_programs(2)

    # phase: load the current layer's input into the persistent bf16 scratch
    @pl.when(jnp.logical_and(layer == 0, tile == 0))
    def _():
        h_in_s[...] = h0_ref[0]                               # padded H0 (bf16)

    @pl.when(jnp.logical_and(layer == 1, tile == 0))
    def _():
        h_in_s[...] = h_out_s[...].astype(jnp.bfloat16)       # h1 -> layer-2 input

    # ---- GraphSAGE('mean') for this dst-row tile ----
    a = a_ref[0]                                              # (TM, M_pad) bf16, A[dst, src]
    inv_deg = invdeg_ref[0]                                   # (TM, 1) f32, 0 where deg == 0
    h_all = h_in_s[...]                                       # (M_pad, Dp) bf16

    # mean aggregation on the MXU (bf16 operands, f32 accumulation)
    h_neigh = jnp.dot(a, h_all, preferred_element_type=jnp.float32) * inv_deg

    row0 = pl.multiple_of(tile * TM, _pow2_divisor(TM))
    h_self = h_in_s[pl.ds(row0, TM), :]                       # (TM, Dp) bf16

    # fused self + neighbor projection: (TM, 2*Dp) @ (2*Dp, Dp); Dp = 128 -> the
    # concat is a clean lane-tile append (no relayout).
    hn = jnp.concatenate([h_self, h_neigh.astype(jnp.bfloat16)], axis=-1)
    out = jnp.dot(hn, w_ref[0], preferred_element_type=jnp.float32) + b_ref[0]
    out = jnp.maximum(out, 0.0)                               # ReLU (f32 VPU)
    h_out_s[pl.ds(row0, TM), :] = out

    # ---- fused computeSim epilogue (hidden state never leaves VMEM) ----
    @pl.when(jnp.logical_and(layer == 1, tile == n_tiles - 1))
    def _():
        h2 = h_out_s[...]                                     # (M_pad, Dp) f32
        tvec = h2[0:Bp, :][:, None, :]                        # time vectors (Bp, 1, Dp)
        lvec = h2[Bp:2 * Bp, :][:, None, :]                   # loc vectors  (Bp, 1, Dp)
        avec = h2[2 * Bp:2 * Bp + Bp * S, :].reshape(Bp, S, Dp)  # app seq   (Bp, S, Dp)

        def _norm(v):
            return v * jax.lax.rsqrt(jnp.sum(v * v, axis=-1, keepdims=True) + 1e-12)

        def cosine(v1, v2):
            return jnp.sum(_norm(v1) * _norm(v2), axis=-1)

        sim_t = jnp.sum(cosine(tvec, (lvec + avec) * 0.5), axis=-1)   # (Bp,)
        sim_l = jnp.sum(cosine(lvec, (tvec + avec) * 0.5), axis=-1)   # (Bp,)
        sim_a = jnp.sum(cosine(avec, (tvec + lvec) * 0.5), axis=-1)   # (Bp,)
        total = sim_t + sim_l + sim_a
        # lane-dense (Bp, 128) store; wrapper reads column 0
        loss_ref[0] = jnp.broadcast_to(total[:, None], (Bp, 128))


def gnn_pair(a_pair, h0_pair, invdeg_pair, wstack, bstack, *, Bp, S, Dp, TM):
    """a_pair: (2, M_pad, M_pad) bf16; h0_pair: (2, M_pad, Dp) bf16;
    invdeg_pair: (2, M_pad, 1) f32; wstack: (2, 2*Dp, Dp) bf16 ([Ws;Wn] per layer);
    bstack: (2, 1, Dp) f32. Returns (2, Bp, 128) f32 loss slab."""
    M_pad = a_pair.shape[1]
    n_tiles = M_pad // TM
    kernel = functools.partial(_gnn_kernel, Bp=Bp, S=S, Dp=Dp, TM=TM)
    return pl.pallas_call(
        kernel,
        out_shape=jax.ShapeDtypeStruct((2, Bp, 128), jnp.float32),
        grid=(2, 2, n_tiles),
        in_specs=[
            pl.BlockSpec((1, TM, M_pad), lambda p, l, t: (p, t, 0)),    # A dst-row tile
            pl.BlockSpec((1, M_pad, Dp), lambda p, l, t: (p, 0, 0)),    # H0 (resident per pass)
            pl.BlockSpec((1, TM, 1), lambda p, l, t: (p, t, 0)),        # inv_deg per dst row
            pl.BlockSpec((1, 2 * Dp, Dp), lambda p, l, t: (l, 0, 0)),   # [Ws; Wn] per layer
            pl.BlockSpec((1, 1, Dp), lambda p, l, t: (l, 0, 0)),        # bias per layer
        ],
        out_specs=pl.BlockSpec((1, Bp, 128), lambda p, l, t: (p, 0, 0)),
        scratch_shapes=[
            pltpu.VMEM((M_pad, Dp), jnp.bfloat16),    # current layer input (persistent)
            pltpu.VMEM((M_pad, Dp), jnp.float32),     # current layer output (h1 / h2)
        ],
        compiler_params=pltpu.CompilerParams(
            dimension_semantics=("parallel", "arbitrary", "arbitrary"),
            vmem_limit_bytes=_pick_vmem_limit_bytes(),
        ),
    )(a_pair, h0_pair, invdeg_pair, wstack, bstack)


# ----------------------------------------------------------------------------
# Plain-JAX glue: node-index construction, negative sampling, subgraph gather.
# ----------------------------------------------------------------------------
def _build_pass(t_idx, l_idx, a_idx, *, adj, tla_emb, B, Bp, S, M_core, M_pad, dim, Dp):
    # grouped, sublane-padded node layout: [time block | loc block | app block]
    t_pad = jnp.zeros((Bp,), jnp.int32).at[:B].set(t_idx.astype(jnp.int32))
    l_pad = jnp.zeros((Bp,), jnp.int32).at[:B].set(l_idx.astype(jnp.int32))
    a_pad = jnp.zeros((Bp, S), jnp.int32).at[:B].set(a_idx.astype(jnp.int32))
    idx_core = jnp.concatenate([t_pad, l_pad, a_pad.reshape(-1)], axis=0)

    vb = jnp.arange(Bp) < B
    valid_core = jnp.concatenate([vb, vb, jnp.repeat(vb, S)], axis=0).astype(jnp.float32)

    idx = jnp.zeros((M_pad,), jnp.int32).at[:M_core].set(idx_core)
    valid = jnp.zeros((M_pad,), jnp.float32).at[:M_core].set(valid_core)

    # TODO(synk): dgl.node_subgraph gather kept as XLA glue (duplicate node ids are
    # treated as distinct identical rows); a scalar-prefetch pl.Element row gather
    # could stream only the needed adjacency/embedding rows for large graphs.
    a_sub = adj[idx][:, idx] * (valid[:, None] * valid[None, :])   # A[dst, src]
    deg = jnp.sum(a_sub, axis=-1, keepdims=True)                   # in-degree per dst
    inv_deg = jnp.where(deg > 0.0, 1.0 / deg, 0.0).astype(jnp.float32)  # DGL: 0-deg -> 0

    h0 = jnp.zeros((M_pad, Dp), jnp.float32).at[:, :dim].set(tla_emb[idx])
    return a_sub.astype(jnp.bfloat16), h0.astype(jnp.bfloat16), inv_deg


def gnn_forward(params, adj, users, times, locs, app_seq, *,
                n_users, n_times, n_locs, n_apps, seq_length, dim, neg_key):
    B = users.shape[0]
    S = seq_length
    Bp = _round_up(max(B, 1), 8)
    Dp = _round_up(max(dim, 1), 128)
    M_core = Bp * (S + 2)
    if M_core <= 256:
        TM = M_core
        M_pad = M_core
    else:
        TM = 256
        M_pad = _round_up(M_core, TM)

    # node indices (grouped layout is a permutation of the torch concat order;
    # GraphSAGE over the induced subgraph is permutation-equivariant)
    t_idx = (n_apps + n_locs + times).reshape(-1)
    l_idx = (n_apps + locs).reshape(-1)

    # negative sampling (torch.randint -> deterministic jax.random); neg_u is sampled
    # but unused, exactly as in the torch forward()
    k_u, k_t, k_l, k_a = jax.random.split(neg_key, 4)
    _neg_u = jax.random.randint(k_u, (B, 1), 0, n_users)
    neg_t = jax.random.randint(k_t, (B, 1), 0, n_times)
    neg_l = jax.random.randint(k_l, (B, 1), 0, n_locs)
    neg_a = jax.random.randint(k_a, (B, S), 0, n_apps)
    nt_idx = (n_apps + n_locs + neg_t).reshape(-1)
    nl_idx = (n_apps + neg_l).reshape(-1)

    build = functools.partial(_build_pass, adj=adj, tla_emb=params["tla_emb"],
                              B=B, Bp=Bp, S=S, M_core=M_core, M_pad=M_pad,
                              dim=dim, Dp=Dp)
    a_pos, h_pos, d_pos = build(t_idx, l_idx, app_seq)
    a_neg, h_neg, d_neg = build(nt_idx, nl_idx, neg_a)

    # TODO(synk): on v7x the binary adjacency could be streamed as fp8 (exact) to
    # halve its DMA/VMEM footprint; kept bf16 here for v5e/v6e portability.
    a_pair = jnp.stack([a_pos, a_neg], axis=0)
    h_pair = jnp.stack([h_pos, h_neg], axis=0)
    d_pair = jnp.stack([d_pos, d_neg], axis=0)

    # fused, zero-padded [Ws; Wn] weights per layer (bf16 for the MXU); biases f32
    def pad_w(w):
        return jnp.zeros((Dp, Dp), jnp.float32).at[:dim, :dim].set(w)

    def pad_b(b):
        return jnp.zeros((1, Dp), jnp.float32).at[:, :dim].set(b)

    w1 = jnp.concatenate([pad_w(params["ws1"]), pad_w(params["wn1"])], axis=0)
    w2 = jnp.concatenate([pad_w(params["ws2"]), pad_w(params["wn2"])], axis=0)
    wstack = jnp.stack([w1, w2], axis=0).astype(jnp.bfloat16)     # (2, 2*Dp, Dp)
    bstack = jnp.stack([pad_b(params["b1"]), pad_b(params["b2"])], axis=0)  # (2, 1, Dp)

    loss = gnn_pair(a_pair, h_pair, d_pair, wstack, bstack,
                    Bp=Bp, S=S, Dp=Dp, TM=TM)
    return loss[0, :B, 0], loss[1, :B, 0]                         # pos_loss, neg_loss


if __name__ == "__main__":
    # small synthetic config
    n_users, n_times, n_locs, n_apps = 8, 6, 5, 10
    dim, hidden_dim, seq_length = 32, 32, 8
    batch_size = 2
    n_nodes = n_times + n_locs + n_apps

    key = jax.random.PRNGKey(0)
    ks = jax.random.split(key, 12)

    scale = 1.0 / jnp.sqrt(jnp.float32(dim))
    params = {
        "tla_emb": jax.random.normal(ks[0], (n_nodes, dim), jnp.float32),
        "ws1": jax.random.normal(ks[1], (dim, dim), jnp.float32) * scale,
        "wn1": jax.random.normal(ks[2], (dim, dim), jnp.float32) * scale,
        "b1":  jax.random.normal(ks[3], (1, dim), jnp.float32) * 0.1,
        "ws2": jax.random.normal(ks[4], (dim, dim), jnp.float32) * scale,
        "wn2": jax.random.normal(ks[5], (dim, dim), jnp.float32) * scale,
        "b2":  jax.random.normal(ks[6], (1, dim), jnp.float32) * 0.1,
    }
    # TODO(synk): headmerge (Linear(8,1)) and linear (Linear(10,dim)) are unused in forward().

    # deterministic synthetic graph adjacency, A[dst, src]
    ii = jnp.arange(n_nodes)[:, None]
    jj = jnp.arange(n_nodes)[None, :]
    adj = (((ii * 7 + jj * 13) % 5) == 0).astype(jnp.float32)
    adj = adj * (1.0 - jnp.eye(n_nodes, dtype=jnp.float32))       # no self-loops

    # deterministic example batch
    users = (jnp.arange(batch_size, dtype=jnp.int32) % n_users)[:, None]
    times = ((jnp.arange(batch_size, dtype=jnp.int32) * 2 + 1) % n_times)[:, None]
    locs = ((jnp.arange(batch_size, dtype=jnp.int32) * 3) % n_locs)[:, None]
    app_seq = (jnp.arange(batch_size * seq_length, dtype=jnp.int32)
               .reshape(batch_size, seq_length) % n_apps)

    pos_loss, neg_loss = gnn_forward(
        params, adj, users, times, locs, app_seq,
        n_users=n_users, n_times=n_times, n_locs=n_locs, n_apps=n_apps,
        seq_length=seq_length, dim=dim, neg_key=ks[7])

    jax.block_until_ready((pos_loss, neg_loss))
    assert pos_loss.shape == (batch_size,) and neg_loss.shape == (batch_size,)
    assert bool(jnp.all(jnp.isfinite(pos_loss))) and bool(jnp.all(jnp.isfinite(neg_loss)))
    print("KERNEL_OK")
</pallas_src>

<mosaic_0001>
module attributes {stable_mosaic.version = 11 : i64} {
  func.func @_gnn_kernel(%arg0: i32, %arg1: i32, %arg2: i32, %arg3: memref<1x80x80xbf16, #tpu.memory_space<vmem>>, %arg4: memref<1x80x128xbf16, #tpu.memory_space<vmem>>, %arg5: memref<1x80x1xf32, #tpu.memory_space<vmem>>, %arg6: memref<1x256x128xbf16, #tpu.memory_space<vmem>>, %arg7: memref<1x1x128xf32, #tpu.memory_space<vmem>>, %arg8: memref<1x8x128xf32, #tpu.memory_space<vmem>>, %arg9: memref<80x128xbf16, #tpu.memory_space<vmem>>, %arg10: memref<80x128xf32, #tpu.memory_space<vmem>>) attributes {dimension_semantics = [#tpu.dimension_semantics<parallel>, #tpu.dimension_semantics<arbitrary>, #tpu.dimension_semantics<arbitrary>], iteration_bounds = array<i64: 2, 2, 1>, scalar_prefetch = 0 : i64, scratch_operands = 2 : i64, tpu.core_type = #tpu.core_type<tc>, window_params = [{transform_indices = @transform_0, window_bounds = array<i64: 1, 80, 80>}, {transform_indices = @transform_1, window_bounds = array<i64: 1, 80, 128>}, {transform_indices = @transform_2, window_bounds = array<i64: 1, 80, 1>}, {transform_indices = @transform_3, window_bounds = array<i64: 1, 256, 128>}, {transform_indices = @transform_4, window_bounds = array<i64: 1, 1, 128>}, {transform_indices = @transform_5, window_bounds = array<i64: 1, 8, 128>}]} {
    %c0_i32 = arith.constant 0 : i32
    %0 = arith.cmpi eq, %arg1, %c0_i32 : i32
    %c0_i32_0 = arith.constant 0 : i32
    %1 = arith.cmpi eq, %arg2, %c0_i32_0 : i32
    %2 = arith.andi %0, %1 : i1
    %3 = arith.extui %2 : i1 to i32
    %c0_i32_1 = arith.constant 0 : i32
    %4 = arith.cmpi ne, %3, %c0_i32_1 : i32
    scf.if %4 {
      %c0_24 = arith.constant 0 : index
      %c0_25 = arith.constant 0 : index
      %c0_26 = arith.constant 0 : index
      %40 = vector.load %arg4[%c0_24, %c0_25, %c0_26] : memref<1x80x128xbf16, #tpu.memory_space<vmem>>, vector<1x80x128xbf16>
      %41 = vector.shape_cast %40 : vector<1x80x128xbf16> to vector<80x128xbf16>
      %c0_27 = arith.constant 0 : index
      %c0_28 = arith.constant 0 : index
      %42 = vector.load %arg9[%c0_27, %c0_28] : memref<80x128xbf16, #tpu.memory_space<vmem>>, vector<80x128xbf16>
      tpu.vector_store %arg9[%c0_27, %c0_28], %41 {strides = array<i32>} : memref<80x128xbf16, #tpu.memory_space<vmem>>, vector<80x128xbf16>,
    } else {
    }
    %c1_i32 = arith.constant 1 : i32
    %5 = arith.cmpi eq, %arg1, %c1_i32 : i32
    %c0_i32_2 = arith.constant 0 : i32
    %6 = arith.cmpi eq, %arg2, %c0_i32_2 : i32
    %7 = arith.andi %5, %6 : i1
    %8 = arith.extui %7 : i1 to i32
    %c0_i32_3 = arith.constant 0 : i32
    %9 = arith.cmpi ne, %8, %c0_i32_3 : i32
    scf.if %9 {
      %c0_24 = arith.constant 0 : index
      %c0_25 = arith.constant 0 : index
      %40 = vector.load %arg10[%c0_24, %c0_25] : memref<80x128xf32, #tpu.memory_space<vmem>>, vector<80x128xf32>
      %41 = arith.truncf %40 : vector<80x128xf32> to vector<80x128xbf16>
      %c0_26 = arith.constant 0 : index
      %c0_27 = arith.constant 0 : index
      %42 = vector.load %arg9[%c0_26, %c0_27] : memref<80x128xbf16, #tpu.memory_space<vmem>>, vector<80x128xbf16>
      tpu.vector_store %arg9[%c0_26, %c0_27], %41 {strides = array<i32>} : memref<80x128xbf16, #tpu.memory_space<vmem>>, vector<80x128xbf16>,
    } else {
    }
    %c0 = arith.constant 0 : index
    %c0_4 = arith.constant 0 : index
    %c0_5 = arith.constant 0 : index
    %10 = vector.load %arg3[%c0, %c0_4, %c0_5] : memref<1x80x80xbf16, #tpu.memory_space<vmem>>, vector<1x80x80xbf16>
    %11 = vector.shape_cast %10 : vector<1x80x80xbf16> to vector<80x80xbf16>
    %c0_6 = arith.constant 0 : index
    %c0_7 = arith.constant 0 : index
    %c0_8 = arith.constant 0 : index
    %12 = vector.load %arg5[%c0_6, %c0_7, %c0_8] : memref<1x80x1xf32, #tpu.memory_space<vmem>>, vector<1x80x1xf32>
    %13 = vector.shape_cast %12 : vector<1x80x1xf32> to vector<80x1xf32>
    %c0_9 = arith.constant 0 : index
    %c0_10 = arith.constant 0 : index
    %14 = vector.load %arg9[%c0_9, %c0_10] : memref<80x128xbf16, #tpu.memory_space<vmem>>, vector<80x128xbf16>
    %cst = arith.constant dense<0.000000e+00> : vector<80x128xf32>
    %15 = tpu.matmul %11, %14, %cst {dimension_numbers = #tpu.dot_dimension_numbers<[1], [0], [0], [1], [0, 0, 1, 1], [], []>} : vector<80x80xbf16>, vector<80x128xbf16>, vector<80x128xf32> -> vector<80x128xf32>
    %16 = vector.broadcast %13 : vector<80x1xf32> to vector<80x128xf32>
    %17 = arith.mulf %15, %16 : vector<80x128xf32>
    %c80_i32 = arith.constant 80 : i32
    %18 = arith.muli %arg2, %c80_i32 : i32
    %19 = tpu.assume_multiple %18, 16 : i32
    %20 = arith.index_cast %19 : i32 to index
    %c0_11 = arith.constant 0 : index
    %21 = vector.load %arg9[%20, %c0_11] : memref<80x128xbf16, #tpu.memory_space<vmem>>, vector<80x128xbf16>
    %22 = arith.truncf %17 : vector<80x128xf32> to vector<80x128xbf16>
    %23 = tpu.concatenate %21, %22 in 1 : vector<80x128xbf16>, vector<80x128xbf16> -> vector<80x256xbf16>
    %c0_12 = arith.constant 0 : index
    %c0_13 = arith.constant 0 : index
    %c0_14 = arith.constant 0 : index
    %24 = vector.load %arg6[%c0_12, %c0_13, %c0_14] : memref<1x256x128xbf16, #tpu.memory_space<vmem>>, vector<1x256x128xbf16>
    %25 = vector.shape_cast %24 : vector<1x256x128xbf16> to vector<256x128xbf16>
    %cst_15 = arith.constant dense<0.000000e+00> : vector<80x128xf32>
    %26 = tpu.matmul %23, %25, %cst_15 {dimension_numbers = #tpu.dot_dimension_numbers<[1], [0], [0], [1], [0, 0, 1, 1], [], []>} : vector<80x256xbf16>, vector<256x128xbf16>, vector<80x128xf32> -> vector<80x128xf32>
    %c0_16 = arith.constant 0 : index
    %c0_17 = arith.constant 0 : index
    %c0_18 = arith.constant 0 : index
    %27 = vector.load %arg7[%c0_16, %c0_17, %c0_18] : memref<1x1x128xf32, #tpu.memory_space<vmem>>, vector<1x1x128xf32>
    %28 = vector.shape_cast %27 : vector<1x1x128xf32> to vector<1x128xf32>
    %29 = vector.broadcast %28 : vector<1x128xf32> to vector<80x128xf32>
    %30 = arith.addf %26, %29 : vector<80x128xf32>
    %cst_19 = arith.constant 0.000000e+00 : f32
    %31 = vector.broadcast %cst_19 : f32 to vector<80x128xf32>
    %32 = arith.maximumf %30, %31 : vector<80x128xf32>
    %33 = arith.index_cast %19 : i32 to index
    %c0_20 = arith.constant 0 : index
    %34 = vector.load %arg10[%33, %c0_20] : memref<80x128xf32, #tpu.memory_space<vmem>>, vector<80x128xf32>
    tpu.vector_store %arg10[%33, %c0_20], %32 {strides = array<i32>} : memref<80x128xf32, #tpu.memory_space<vmem>>, vector<80x128xf32>,
    %c1_i32_21 = arith.constant 1 : i32
    %35 = arith.cmpi eq, %arg1, %c1_i32_21 : i32
    %c0_i32_22 = arith.constant 0 : i32
    %36 = arith.cmpi eq, %arg2, %c0_i32_22 : i32
    %37 = arith.andi %35, %36 : i1
    %38 = arith.extui %37 : i1 to i32
    %c0_i32_23 = arith.constant 0 : i32
    %39 = arith.cmpi ne, %38, %c0_i32_23 : i32
    scf.if %39 {
      %c0_24 = arith.constant 0 : index
      %c0_25 = arith.constant 0 : index
      %40 = vector.load %arg10[%c0_24, %c0_25] : memref<80x128xf32, #tpu.memory_space<vmem>>, vector<80x128xf32>
      %41 = vector.extract_strided_slice %40 {offsets = [0, 0], sizes = [8, 128], strides = [1, 1]} : vector<80x128xf32> to vector<8x128xf32>
      %42 = vector.shape_cast %41 : vector<8x128xf32> to vector<8x1x128xf32>
      %43 = vector.extract_strided_slice %40 {offsets = [8, 0], sizes = [8, 128], strides = [1, 1]} : vector<80x128xf32> to vector<8x128xf32>
      %44 = vector.shape_cast %43 : vector<8x128xf32> to vector<8x1x128xf32>
      %45 = vector.extract_strided_slice %40 {offsets = [16, 0], sizes = [64, 128], strides = [1, 1]} : vector<80x128xf32> to vector<64x128xf32>
      %46 = vector.shape_cast %45 : vector<64x128xf32> to vector<8x8x128xf32>
      %47 = vector.broadcast %44 : vector<8x1x128xf32> to vector<8x8x128xf32>
      %48 = arith.addf %47, %46 : vector<8x8x128xf32>
      %cst_26 = arith.constant 5.000000e-01 : f32
      %49 = vector.broadcast %cst_26 : f32 to vector<8x8x128xf32>
      %50 = arith.mulf %48, %49 : vector<8x8x128xf32>
      %51 = arith.mulf %42, %42 : vector<8x1x128xf32>
      %cst_27 = arith.constant dense<0.000000e+00> : vector<8x1xf32>
      %52 = vector.multi_reduction <add>, %51, %cst_27 [2] : vector<8x1x128xf32> to vector<8x1xf32>
      %53 = vector.shape_cast %52 : vector<8x1xf32> to vector<8x1x1xf32>
      %cst_28 = arith.constant 9.99999996E-13 : f32
      %54 = vector.broadcast %cst_28 : f32 to vector<8x1x1xf32>
      %55 = arith.addf %53, %54 : vector<8x1x1xf32>
      %56 = math.rsqrt %55 : vector<8x1x1xf32>
      %57 = vector.broadcast %56 : vector<8x1x1xf32> to vector<8x1x128xf32>
      %58 = arith.mulf %42, %57 : vector<8x1x128xf32>
      %59 = arith.mulf %50, %50 : vector<8x8x128xf32>
      %cst_29 = arith.constant dense<0.000000e+00> : vector<8x8xf32>
      %60 = vector.multi_reduction <add>, %59, %cst_29 [2] : vector<8x8x128xf32> to vector<8x8xf32>
      %61 = vector.shape_cast %60 : vector<8x8xf32> to vector<8x8x1xf32>
      %cst_30 = arith.constant 9.99999996E-13 : f32
      %62 = vector.broadcast %cst_30 : f32 to vector<8x8x1xf32>
      %63 = arith.addf %61, %62 : vector<8x8x1xf32>
      %64 = math.rsqrt %63 : vector<8x8x1xf32>
      %65 = vector.broadcast %64 : vector<8x8x1xf32> to vector<8x8x128xf32>
      %66 = arith.mulf %50, %65 : vector<8x8x128xf32>
      %67 = vector.broadcast %58 : vector<8x1x128xf32> to vector<8x8x128xf32>
      %68 = arith.mulf %67, %66 : vector<8x8x128xf32>
      %cst_31 = arith.constant dense<0.000000e+00> : vector<8x8xf32>
      %69 = vector.multi_reduction <add>, %68, %cst_31 [2] : vector<8x8x128xf32> to vector<8x8xf32>
      %cst_32 = arith.constant dense<0.000000e+00> : vector<8xf32>
      %70 = vector.multi_reduction <add>, %69, %cst_32 [1] : vector<8x8xf32> to vector<8xf32>
      %71 = vector.broadcast %42 : vector<8x1x128xf32> to vector<8x8x128xf32>
      %72 = arith.addf %71, %46 : vector<8x8x128xf32>
      %cst_33 = arith.constant 5.000000e-01 : f32
      %73 = vector.broadcast %cst_33 : f32 to vector<8x8x128xf32>
      %74 = arith.mulf %72, %73 : vector<8x8x128xf32>
      %75 = arith.mulf %44, %44 : vector<8x1x128xf32>
      %cst_34 = arith.constant dense<0.000000e+00> : vector<8x1xf32>
      %76 = vector.multi_reduction <add>, %75, %cst_34 [2] : vector<8x1x128xf32> to vector<8x1xf32>
      %77 = vector.shape_cast %76 : vector<8x1xf32> to vector<8x1x1xf32>
      %cst_35 = arith.constant 9.99999996E-13 : f32
      %78 = vector.broadcast %cst_35 : f32 to vector<8x1x1xf32>
      %79 = arith.addf %77, %78 : vector<8x1x1xf32>
      %80 = math.rsqrt %79 : vector<8x1x1xf32>
      %81 = vector.broadcast %80 : vector<8x1x1xf32> to vector<8x1x128xf32>
      %82 = arith.mulf %44, %81 : vector<8x1x128xf32>
      %83 = arith.mulf %74, %74 : vector<8x8x128xf32>
      %cst_36 = arith.constant dense<0.000000e+00> : vector<8x8xf32>
      %84 = vector.multi_reduction <add>, %83, %cst_36 [2] : vector<8x8x128xf32> to vector<8x8xf32>
      %85 = vector.shape_cast %84 : vector<8x8xf32> to vector<8x8x1xf32>
      %cst_37 = arith.constant 9.99999996E-13 : f32
      %86 = vector.broadcast %cst_37 : f32 to vector<8x8x1xf32>
      %87 = arith.addf %85, %86 : vector<8x8x1xf32>
      %88 = math.rsqrt %87 : vector<8x8x1xf32>
      %89 = vector.broadcast %88 : vector<8x8x1xf32> to vector<8x8x128xf32>
      %90 = arith.mulf %74, %89 : vector<8x8x128xf32>
      %91 = vector.broadcast %82 : vector<8x1x128xf32> to vector<8x8x128xf32>
      %92 = arith.mulf %91, %90 : vector<8x8x128xf32>
      %cst_38 = arith.constant dense<0.000000e+00> : vector<8x8xf32>
      %93 = vector.multi_reduction <add>, %92, %cst_38 [2] : vector<8x8x128xf32> to vector<8x8xf32>
      %cst_39 = arith.constant dense<0.000000e+00> : vector<8xf32>
      %94 = vector.multi_reduction <add>, %93, %cst_39 [1] : vector<8x8xf32> to vector<8xf32>
      %95 = arith.addf %42, %44 : vector<8x1x128xf32>
      %cst_40 = arith.constant 5.000000e-01 : f32
      %96 = vector.broadcast %cst_40 : f32 to vector<8x1x128xf32>
      %97 = arith.mulf %95, %96 : vector<8x1x128xf32>
      %98 = arith.mulf %46, %46 : vector<8x8x128xf32>
      %cst_41 = arith.constant dense<0.000000e+00> : vector<8x8xf32>
      %99 = vector.multi_reduction <add>, %98, %cst_41 [2] : vector<8x8x128xf32> to vector<8x8xf32>
      %100 = vector.shape_cast %99 : vector<8x8xf32> to vector<8x8x1xf32>
      %cst_42 = arith.constant 9.99999996E-13 : f32
      %101 = vector.broadcast %cst_42 : f32 to vector<8x8x1xf32>
      %102 = arith.addf %100, %101 : vector<8x8x1xf32>
      %103 = math.rsqrt %102 : vector<8x8x1xf32>
      %104 = vector.broadcast %103 : vector<8x8x1xf32> to vector<8x8x128xf32>
      %105 = arith.mulf %46, %104 : vector<8x8x128xf32>
      %106 = arith.mulf %97, %97 : vector<8x1x128xf32>
      %cst_43 = arith.constant dense<0.000000e+00> : vector<8x1xf32>
      %107 = vector.multi_reduction <add>, %106, %cst_43 [2] : vector<8x1x128xf32> to vector<8x1xf32>
      %108 = vector.shape_cast %107 : vector<8x1xf32> to vector<8x1x1xf32>
      %cst_44 = arith.constant 9.99999996E-13 : f32
      %109 = vector.broadcast %cst_44 : f32 to vector<8x1x1xf32>
      %110 = arith.addf %108, %109 : vector<8x1x1xf32>
      %111 = math.rsqrt %110 : vector<8x1x1xf32>
      %112 = vector.broadcast %111 : vector<8x1x1xf32> to vector<8x1x128xf32>
      %113 = arith.mulf %97, %112 : vector<8x1x128xf32>
      %114 = vector.broadcast %113 : vector<8x1x128xf32> to vector<8x8x128xf32>
      %115 = arith.mulf %105, %114 : vector<8x8x128xf32>
      %cst_45 = arith.constant dense<0.000000e+00> : vector<8x8xf32>
      %116 = vector.multi_reduction <add>, %115, %cst_45 [2] : vector<8x8x128xf32> to vector<8x8xf32>
      %cst_46 = arith.constant dense<0.000000e+00> : vector<8xf32>
      %117 = vector.multi_reduction <add>, %116, %cst_46 [1] : vector<8x8xf32> to vector<8xf32>
      %118 = arith.addf %70, %94 : vector<8xf32>
      %119 = arith.addf %118, %117 : vector<8xf32>
      %120 = vector.shape_cast %119 : vector<8xf32> to vector<8x1xf32>
      %121 = vector.shape_cast %120 : vector<8x1xf32> to vector<8x1xf32>
      %122 = vector.broadcast %121 : vector<8x1xf32> to vector<8x128xf32>
      %c0_47 = arith.constant 0 : index
      %c0_48 = arith.constant 0 : index
      %c0_49 = arith.constant 0 : index
      %123 = vector.load %arg8[%c0_47, %c0_48, %c0_49] : memref<1x8x128xf32, #tpu.memory_space<vmem>>, vector<1x8x128xf32>
      %124 = vector.shape_cast %123 : vector<1x8x128xf32> to vector<8x128xf32>
      %125 = vector.shape_cast %122 : vector<8x128xf32> to vector<1x8x128xf32>
      tpu.vector_store %arg8[%c0_47, %c0_48, %c0_49], %125 {strides = array<i32>} : memref<1x8x128xf32, #tpu.memory_space<vmem>>, vector<1x8x128xf32>,
    } else {
    }
    return
  }
  func.func @transform_0(%arg0: i32, %arg1: i32, %arg2: i32) -> (i32, i32, i32) {
    %c0_i32 = arith.constant 0 : i32
    %c0_i32_0 = arith.constant 0 : i32
    return %arg0, %arg2, %c0_i32 : i32, i32, i32
  }
  func.func @transform_1(%arg0: i32, %arg1: i32, %arg2: i32) -> (i32, i32, i32) {
    %c0_i32 = arith.constant 0 : i32
    %c0_i32_0 = arith.constant 0 : i32
    %c0_i32_1 = arith.constant 0 : i32
    return %arg0, %c0_i32, %c0_i32_0 : i32, i32, i32
  }
  func.func @transform_2(%arg0: i32, %arg1: i32, %arg2: i32) -> (i32, i32, i32) {
    %c0_i32 = arith.constant 0 : i32
    %c0_i32_0 = arith.constant 0 : i32
    return %arg0, %arg2, %c0_i32 : i32, i32, i32
  }
  func.func @transform_3(%arg0: i32, %arg1: i32, %arg2: i32) -> (i32, i32, i32) {
    %c0_i32 = arith.constant 0 : i32
    %c0_i32_0 = arith.constant 0 : i32
    %c0_i32_1 = arith.constant 0 : i32
    return %arg1, %c0_i32, %c0_i32_0 : i32, i32, i32
  }
  func.func @transform_4(%arg0: i32, %arg1: i32, %arg2: i32) -> (i32, i32, i32) {
    %c0_i32 = arith.constant 0 : i32
    %c0_i32_0 = arith.constant 0 : i32
    %c0_i32_1 = arith.constant 0 : i32
    return %arg1, %c0_i32, %c0_i32_0 : i32, i32, i32
  }
  func.func @transform_5(%arg0: i32, %arg1: i32, %arg2: i32) -> (i32, i32, i32) {
    %c0_i32 = arith.constant 0 : i32
    %c0_i32_0 = arith.constant 0 : i32
    %c0_i32_1 = arith.constant 0 : i32
    return %arg0, %c0_i32, %c0_i32_0 : i32, i32, i32
  }
}

</mosaic_0001>

<llo_original>
// kernel: tpu_custom_call.1
$region0: #{tpu_custom_call.1}
  #allocation0 [shape = 'u32[]', space=smem, size = 0x4, offset = 0x4, fixed_abs, tag = 'smem constant byte address 0x4 - core index']
  #allocation1 [shape = 'u32[72,128]{1,0:T(1,128)}', space=vmem, size = 0x9000, scoped, tag = 'internal scratch']
  #allocation2 [shape = 'bf16[80,128]{1,0:T(8,128)(2,1)}', space=vmem, size = 0x5000, scoped, tag = 'scratch operand']
  #allocation3 [shape = 'f32[80,128]{1,0:T(8,128)}', space=vmem, size = 0xa000, scoped, tag = 'scratch operand']
  %s0 = inlined_call_operand.vmem [shape: bf16[2,80,80], index: 0, kind: input, shape index: {}]
  %s1 = inlined_call_operand.vmem [shape: bf16[2,80,128], index: 1, kind: input, shape index: {}]
  %s2 = inlined_call_operand.vmem [shape: f32[2,80,1], index: 2, kind: input, shape index: {}]
  %s3 = inlined_call_operand.hbm [shape: bf16[2,256,128], index: 3, kind: input, shape index: {}]
  %s4 = inlined_call_operand.vmem [shape: f32[2,1,128], index: 4, kind: input, shape index: {}]
  %s5 = inlined_call_operand.hbm [shape: f32[2,8,128], index: 5, kind: output, shape index: {}]
  %s6 = sld [smem:[#allocation0]]
  $region69: #{tpu_custom_call.1} parent=0
    _
  %s8 = ssub.s32 1, %s6
  %s9 = scalar_select 0, %s8, %s6
  $region1: #{tpu_custom_call.1} parent=0
    #allocation4 [shape = 'u8[131072]{0}', space=vmem, size = 0x20000, scoped, tag = 'input window, operand 3']
    #allocation5 [shape = 's32[2]{0}', space=sflag, size = 0x8, scoped, tag = 'scoped memory for tpu_custom_call.1']
    #allocation6 [shape = 's32[2]{0}', space=sflag, size = 0x8, scoped, tag = 'scoped memory for tpu_custom_call.1']
    #allocation7 [shape = 'u8[8192]{0}', space=vmem, size = 0x2000, scoped, tag = 'output window, operand 0']
    %10 = vsyncpa [#allocation5], 0
    %s11 = scalar_lea.sflag [#allocation5], 1
    %12 = vsyncpa %s11, 0
    %13 = vsyncpa [#allocation6], 0
    %s14 = scalar_lea.sflag [#allocation6], 1
    %15 = vsyncpa %s14, 0
    loop: start=0, step=1, limit=6
    $region2: #{tpu_custom_call.1} parent=1 // loop_pre_header
      _
    $region3: #{tpu_custom_call.1} parent=1 // loop_header
      %s17 = sphi 0, %s21
      %p18 = scmp.ge.s32.totalorder %s17, 6
      %s24 = sphi 0, %s43
      %s25 = sphi 0, %s39
      %s26 = sphi 0, %s35
      %s27 = sphi 0, %s24
      %s28 = sphi 0, %s25
      %s29 = sphi 0, %s26
      %s30 = sphi 0, %s27
      %s31 = sphi 0, %s28
      %s32 = sphi 0, %s29
      %s48 = sphi 0, %s50
      %s51 = sphi 0, %s48
      %s52 = sphi 0, %s51
      %s68 = sphi 0, %s52
      %s74 = sphi 0, %s76
      %s77 = sphi 0, %s74
      %s78 = sphi 0, %s77
      %s94 = sphi 0, %s78
      %s102 = sphi 0, %s104
      %s105 = sphi 0, %s102
      %s106 = sphi 0, %s105
      %s122 = sphi 0, %s106
      %s128 = sphi 0, %s130
      %s131 = sphi 0, %s128
      %s132 = sphi 0, %s131
      %s148 = sphi 0, %s132
      %s154 = sphi 0, %s156
      %s157 = sphi 0, %s154
      %s158 = sphi 0, %s157
      %s174 = sphi 0, %s158
      %s180 = sphi 0, %s182
      %s183 = sphi 0, %s180
      %s184 = sphi 0, %s183
      %s200 = sphi 0, %s184
    $region4: #{tpu_custom_call.1} parent=1 // loop_header_branch
      %20 = sbr.rel (%p18) target = $region8
    $region5: #{tpu_custom_call.1} parent=1 // loop_body
      %s22 = ssub.s32 %s17, 1
      %s23 = ssub.s32 %s17, 2
      %s33 = sadd.s32 1, %s26
      %p34 = scmp.ge.s32.totalorder %s33, 1
      %s35 = scalar_select %p34, 0, %s33
      %s36 = sadd.s32 1, %s25
      %s37 = scalar_select %p34, %s36, %s25
      %p38 = scmp.ge.s32.totalorder %s37, 2
      %s39 = scalar_select %p38, 0, %s37
      %s40 = sadd.s32 1, %s24
      %s41 = scalar_select %p38, %s40, %s24
      %p42 = scmp.ge.s32.totalorder %s41, 2
      %s43 = scalar_select %p42, 0, %s41
      %s44 = ssub.s32 %s24, %s43
      %s45 = ssub.s32 %s26, %s35
      %s46 = sor.u32 %s44, %s45
      %p47 = scmp.eq.s32.totalorder %s46, 0
      %s49 = sadd.s32 %s48, 1
      %s50 = scalar_select %p47, %s48, %s49
      %p53 = pneg %p47
      %p54 = scmp.eq.s32.totalorder %s17, 3
      %p55 = por %p53, %p54
      %p56 = scmp.ne.s32.totalorder %s48, %s51
      %p57 = scmp.eq.s32.totalorder %s17, 0
      %p58 = por %p56, %p57
      %p59 = scmp.ne.s32.totalorder %s48, %s51
      %p60 = scmp.eq.s32.totalorder %s22, 3
      %p61 = por %p59, %p60
      %p62 = scmp.ne.s32.totalorder %s51, %s52
      %p63 = scmp.eq.s32.totalorder %s22, 0
      %p64 = por %p62, %p63
      %p65 = scmp.ne.s32.totalorder %s51, %s52
      %p66 = scmp.eq.s32.totalorder %s23, 3
      %p67 = por %p65, %p66
      %p69 = scmp.ne.s32.totalorder %s52, %s68
      %p70 = scmp.eq.s32.totalorder %s23, 0
      %p71 = por %p69, %p70
      %s72 = ssub.s32 %s24, %s43
      %p73 = scmp.eq.s32.totalorder %s72, 0
      %s75 = sadd.s32 %s74, 1
      %s76 = scalar_select %p73, %s74, %s75
      %p79 = pneg %p73
      %p80 = scmp.eq.s32.totalorder %s17, 3
      %p81 = por %p79, %p80
      %p82 = scmp.ne.s32.totalorder %s74, %s77
      %p83 = scmp.eq.s32.totalorder %s17, 0
      %p84 = por %p82, %p83
      %p85 = scmp.ne.s32.totalorder %s74, %s77
      %p86 = scmp.eq.s32.totalorder %s22, 3
      %p87 = por %p85, %p86
      %p88 = scmp.ne.s32.totalorder %s77, %s78
      %p89 = scmp.eq.s32.totalorder %s22, 0
      %p90 = por %p88, %p89
      %p91 = scmp.ne.s32.totalorder %s77, %s78
      %p92 = scmp.eq.s32.totalorder %s23, 3
      %p93 = por %p91, %p92
      %p95 = scmp.ne.s32.totalorder %s78, %s94
      %p96 = scmp.eq.s32.totalorder %s23, 0
      %p97 = por %p95, %p96
      %s98 = ssub.s32 %s24, %s43
      %s99 = ssub.s32 %s26, %s35
      %s100 = sor.u32 %s98, %s99
      %p101 = scmp.eq.s32.totalorder %s100, 0
      %s103 = sadd.s32 %s102, 1
      %s104 = scalar_select %p101, %s102, %s103
      %p107 = pneg %p101
      %p108 = scmp.eq.s32.totalorder %s17, 3
      %p109 = por %p107, %p108
      %p110 = scmp.ne.s32.totalorder %s102, %s105
      %p111 = scmp.eq.s32.totalorder %s17, 0
      %p112 = por %p110, %p111
      %p113 = scmp.ne.s32.totalorder %s102, %s105
      %p114 = scmp.eq.s32.totalorder %s22, 3
      %p115 = por %p113, %p114
      %p116 = scmp.ne.s32.totalorder %s105, %s106
      %p117 = scmp.eq.s32.totalorder %s22, 0
      %p118 = por %p116, %p117
      %p119 = scmp.ne.s32.totalorder %s105, %s106
      %p120 = scmp.eq.s32.totalorder %s23, 3
      %p121 = por %p119, %p120
      %p123 = scmp.ne.s32.totalorder %s106, %s122
      %p124 = scmp.eq.s32.totalorder %s23, 0
      %p125 = por %p123, %p124
      %s126 = ssub.s32 %s25, %s39
      %p127 = scmp.eq.s32.totalorder %s126, 0
      %s129 = sadd.s32 %s128, 1
      %s130 = scalar_select %p127, %s128, %s129
      %p133 = pneg %p127
      %p134 = scmp.eq.s32.totalorder %s17, 3
      %p135 = por %p133, %p134
      %p136 = scmp.ne.s32.totalorder %s128, %s131
      %p137 = scmp.eq.s32.totalorder %s17, 0
      %p138 = por %p136, %p137
      %p139 = scmp.ne.s32.totalorder %s128, %s131
      %p140 = scmp.eq.s32.totalorder %s22, 3
      %p141 = por %p139, %p140
      %p142 = scmp.ne.s32.totalorder %s131, %s132
      %p143 = scmp.eq.s32.totalorder %s22, 0
      %p144 = por %p142, %p143
      %p145 = scmp.ne.s32.totalorder %s131, %s132
      %p146 = scmp.eq.s32.totalorder %s23, 3
      %p147 = por %p145, %p146
      %p149 = scmp.ne.s32.totalorder %s132, %s148
      %p150 = scmp.eq.s32.totalorder %s23, 0
      %p151 = por %p149, %p150
      %s152 = ssub.s32 %s25, %s39
      %p153 = scmp.eq.s32.totalorder %s152, 0
      %s155 = sadd.s32 %s154, 1
      %s156 = scalar_select %p153, %s154, %s155
      %p159 = pneg %p153
      %p160 = scmp.eq.s32.totalorder %s17, 3
      %p161 = por %p159, %p160
      %p162 = scmp.ne.s32.totalorder %s154, %s157
      %p163 = scmp.eq.s32.totalorder %s17, 0
      %p164 = por %p162, %p163
      %p165 = scmp.ne.s32.totalorder %s154, %s157
      %p166 = scmp.eq.s32.totalorder %s22, 3
      %p167 = por %p165, %p166
      %p168 = scmp.ne.s32.totalorder %s157, %s158
      %p169 = scmp.eq.s32.totalorder %s22, 0
      %p170 = por %p168, %p169
      %p171 = scmp.ne.s32.totalorder %s157, %s158
      %p172 = scmp.eq.s32.totalorder %s23, 3
      %p173 = por %p171, %p172
      %p175 = scmp.ne.s32.totalorder %s158, %s174
      %p176 = scmp.eq.s32.totalorder %s23, 0
      %p177 = por %p175, %p176
      %s178 = ssub.s32 %s24, %s43
      %p179 = scmp.eq.s32.totalorder %s178, 0
      %s181 = sadd.s32 %s180, 1
      %s182 = scalar_select %p179, %s180, %s181
      %p185 = pneg %p179
      %p186 = scmp.eq.s32.totalorder %s17, 3
      %p187 = por %p185, %p186
      %p188 = scmp.ne.s32.totalorder %s180, %s183
      %p189 = scmp.eq.s32.totalorder %s17, 0
      %p190 = por %p188, %p189
      %p191 = scmp.ne.s32.totalorder %s180, %s183
      %p192 = scmp.eq.s32.totalorder %s22, 3
      %p193 = por %p191, %p192
      %p194 = scmp.ne.s32.totalorder %s183, %s184
      %p195 = scmp.eq.s32.totalorder %s22, 0
      %p196 = por %p194, %p195
      %p197 = scmp.ne.s32.totalorder %s183, %s184
      %p198 = scmp.eq.s32.totalorder %s23, 3
      %p199 = por %p197, %p198
      %p201 = scmp.ne.s32.totalorder %s184, %s200
      %p202 = scmp.eq.s32.totalorder %s23, 0
      %p203 = por %p201, %p202
      %p204 = scmp.le.s32.totalorder 1, %s17
      %p205 = scmp.lt.s32.totalorder %s17, 5
      %p206 = pnand %p204, %p205
      %p207 = pneg %p206
      // Predicated region
      $region9: #{tpu_custom_call.1} parent=5 // pred_check
        _
      $region10: #{tpu_custom_call.1} parent=5 // pred_check_branch
        %209 = sbr.rel (%p206) target = $region12
      $region11: #{tpu_custom_call.1} parent=5 // pred_region
        %s210 = ssub.s32 %s17, 1
      $region12: #{tpu_custom_call.1} parent=5 // pred_fallthru
        _
      %p211 = scmp.lt.s32.totalorder %s17, 4
      // Predicated region
      $region13: #{tpu_custom_call.1} parent=5 // pred_check
        %p212 = pneg %p211
      $region14: #{tpu_custom_call.1} parent=5 // pred_check_branch
        %214 = sbr.rel (%p212) target = $region16
      $region15: #{tpu_custom_call.1} parent=5 // pred_region
        // Predicated region
        $region17: #{tpu_custom_call.1} parent=15 // pred_check
          %p215 = pneg %p58
        $region18: #{tpu_custom_call.1} parent=15 // pred_check_branch
          %217 = sbr.rel (%p215) target = $region20
        $region19: #{tpu_custom_call.1} parent=15 // pred_region
          %s218 = smul.u32 10, %s26
          %p219 = scmp.lt.s32.totalorder %s24, 1
          %s220 = scalar_select %p219, %s24, 1
          %p221 = scmp.lt.s32.totalorder %s218, 9
          %s222 = scalar_select %p221, %s218, 9
          %s223 = smul.addr %s220, 10
          %s224 = sadd.s32 %s222, %s223
          %s225 = smul.addr %s224, 4
          %s226 = scalar_lea.vmem %s0, %s225
          %s227 = smul.u32 10, %s26
        $region20: #{tpu_custom_call.1} parent=15 // pred_fallthru
          _
        // Predicated region
        $region21: #{tpu_custom_call.1} parent=15 // pred_check
          %p228 = pneg %p84
        $region22: #{tpu_custom_call.1} parent=15 // pred_check_branch
          %230 = sbr.rel (%p228) target = $region24
        $region23: #{tpu_custom_call.1} parent=15 // pred_region
          %p231 = scmp.lt.s32.totalorder %s24, 1
          %s232 = scalar_select %p231, %s24, 1
          %s233 = smul.addr %s232, 10
          %s234 = smul.addr %s233, 4
          %s235 = scalar_lea.vmem %s1, %s234
        $region24: #{tpu_custom_call.1} parent=15 // pred_fallthru
          _
        // Predicated region
        $region25: #{tpu_custom_call.1} parent=15 // pred_check
          %p236 = pneg %p112
        $region26: #{tpu_custom_call.1} parent=15 // pred_check_branch
          %238 = sbr.rel (%p236) target = $region28
        $region27: #{tpu_custom_call.1} parent=15 // pred_region
          %s239 = smul.u32 10, %s26
          %p240 = scmp.lt.s32.totalorder %s24, 1
          %s241 = scalar_select %p240, %s24, 1
          %p242 = scmp.lt.s32.totalorder %s239, 9
          %s243 = scalar_select %p242, %s239, 9
          %s244 = smul.addr %s241, 10
          %s245 = sadd.s32 %s243, %s244
          %s246 = smul.addr %s245, 8
          %s247 = scalar_lea.vmem %s2, %s246
          %s248 = smul.u32 10, %s26
        $region28: #{tpu_custom_call.1} parent=15 // pred_fallthru
          _
        // Predicated region
        $region29: #{tpu_custom_call.1} parent=15 // pred_check
          %p249 = pneg %p138
        $region30: #{tpu_custom_call.1} parent=15 // pred_check_branch
          %251 = sbr.rel (%p249) target = $region32
        $region31: #{tpu_custom_call.1} parent=15 // pred_region
          %s252 = sand.u32 %s128, 1
          %s253 = scalar_lea.sflag [#allocation5], %s252
          %s254 = sand.u32 %s128, 1
          %s255 = smul.addr %s254, 128
          %s256 = scalar_lea.vmem [#allocation4], %s255
          %258 = vsyncadd %s253, 0
          %s259 = smul.addr %s25, 32
          %s260 = smul.addr %s259, 4
          %s261 = scalar_lea.hbm %s3, %s260
          %s262 = sshll.u32 %s261, 4
          %s263 = int_to_ptr.hbm [resolvable:$true] %s262
          %s264 = sshll.u32 %s256, 4
          %s265 = int_to_ptr.vmem [resolvable:$true] %s264
          %270 = dma.hbm_to_vmem [thread:$0]  %s263, 2048, %s265, %s253, 64, 64, 4
        $region32: #{tpu_custom_call.1} parent=15 // pred_fallthru
          _
        // Predicated region
        $region33: #{tpu_custom_call.1} parent=15 // pred_check
          %p271 = pneg %p164
        $region34: #{tpu_custom_call.1} parent=15 // pred_check_branch
          %273 = sbr.rel (%p271) target = $region36
        $region35: #{tpu_custom_call.1} parent=15 // pred_region
          %p274 = scmp.lt.s32.totalorder %s25, 1
          %s275 = scalar_select %p274, %s25, 1
          %s276 = scalar_lea.vmem %s4, %s275
        $region36: #{tpu_custom_call.1} parent=15 // pred_fallthru
          _
      $region16: #{tpu_custom_call.1} parent=5 // pred_fallthru
        _
      %p277 = scmp.le.s32.totalorder 1, %s17
      %p278 = scmp.lt.s32.totalorder %s17, 5
      %p279 = pnand %p277, %p278
      %p280 = pneg %p279
      // Predicated region
      $region37: #{tpu_custom_call.1} parent=5 // pred_check
        _
      $region38: #{tpu_custom_call.1} parent=5 // pred_check_branch
        %282 = sbr.rel (%p279) target = $region40
      $region39: #{tpu_custom_call.1} parent=5 // pred_region
        %s283 = ssub.s32 %s17, 1
        %s284 = sand.u32 %s131, 1
        %s285 = scalar_lea.sflag [#allocation5], %s284
        %s286 = sand.u32 %s131, 1
        %s287 = smul.addr %s286, 128
        %s288 = scalar_lea.vmem [#allocation4], %s287
        // Predicated region
        $region41: #{tpu_custom_call.1} parent=39 // pred_check
          %p289 = pneg %p144
        $region42: #{tpu_custom_call.1} parent=39 // pred_check_branch
          %291 = sbr.rel (%p289) target = $region44
        $region43: #{tpu_custom_call.1} parent=39 // pred_region
          %293 = dma.done %s285, 2048
        $region44: #{tpu_custom_call.1} parent=39 // pred_fallthru
          _
        %s294 = smul.u32 10, %s29
        %p295 = scmp.lt.s32.totalorder %s27, 1
        %s296 = scalar_select %p295, %s27, 1
        %p297 = scmp.lt.s32.totalorder %s294, 9
        %s298 = scalar_select %p297, %s294, 9
        %s299 = smul.addr %s296, 10
        %s300 = sadd.s32 %s298, %s299
        %s301 = smul.addr %s300, 4
        %s302 = scalar_lea.vmem %s0, %s301
        %p303 = pneg %p64
        %p304 = pneg %p61
        %p305 = scmp.lt.s32.totalorder %s27, 1
        %s306 = scalar_select %p305, %s27, 1
        %s307 = smul.addr %s306, 10
        %s308 = smul.addr %s307, 4
        %s309 = scalar_lea.vmem %s1, %s308
        %p310 = pneg %p90
        %p311 = pneg %p87
        %s312 = smul.u32 10, %s29
        %p313 = scmp.lt.s32.totalorder %s27, 1
        %s314 = scalar_select %p313, %s27, 1
        %p315 = scmp.lt.s32.totalorder %s312, 9
        %s316 = scalar_select %p315, %s312, 9
        %s317 = smul.addr %s314, 10
        %s318 = sadd.s32 %s316, %s317
        %s319 = smul.addr %s318, 8
        %s320 = scalar_lea.vmem %s2, %s319
        %p321 = pneg %p118
        %p322 = pneg %p115
        %s323 = sand.u32 %s131, 1
        %s324 = scalar_lea.sflag [#allocation5], %s323
        %s325 = sand.u32 %s131, 1
        %s326 = smul.addr %s325, 128
        %s327 = scalar_lea.vmem [#allocation4], %s326
        %p328 = pneg %p144
        %p329 = pneg %p141
        %p330 = scmp.lt.s32.totalorder %s28, 1
        %s331 = scalar_select %p330, %s28, 1
        %s332 = scalar_lea.vmem %s4, %s331
        %p333 = pneg %p170
        %p334 = pneg %p167
        %p335 = pneg %p196
        %p336 = pneg %p193
        %s337 = sand.u32 %s183, 1
        %s338 = scalar_lea.sflag [#allocation6], %s337
        %s339 = sand.u32 %s183, 1
        %s340 = smul.addr %s339, 8
        %s341 = scalar_lea.vmem [#allocation7], %s340
        %s342 = smul.u32 10, %s29
        %p343 = scmp.lt.s32.totalorder %s27, 1
        %s344 = scalar_select %p343, %s27, 1
        %p345 = scmp.lt.s32.totalorder %s342, 9
        %s346 = scalar_select %p345, %s342, 9
        %s347 = smul.addr %s344, 10
        %s348 = sadd.s32 %s346, %s347
        %s349 = smul.addr %s348, 4
        %s350 = scalar_lea.vmem %s0, %s349
        %s351 = smul.u32 10, %s29
        %p352 = scmp.lt.s32.totalorder %s27, 1
        %s353 = scalar_select %p352, %s27, 1
        %s354 = smul.addr %s353, 10
        %s355 = smul.addr %s354, 4
        %s356 = scalar_lea.vmem %s1, %s355
        %s357 = smul.u32 10, %s29
        %p358 = scmp.lt.s32.totalorder %s27, 1
        %s359 = scalar_select %p358, %s27, 1
        %p360 = scmp.lt.s32.totalorder %s357, 9
        %s361 = scalar_select %p360, %s357, 9
        %s362 = smul.addr %s359, 10
        %s363 = sadd.s32 %s361, %s362
        %s364 = smul.addr %s363, 8
        %s365 = scalar_lea.vmem %s2, %s364
        %s366 = smul.u32 10, %s29
        %p367 = scmp.lt.s32.totalorder %s28, 1
        %s368 = scalar_select %p367, %s28, 1
        %s369 = scalar_lea.vmem %s4, %s368
        %p371 = scmp.eq.s32.totalorder %s28, 0
        %p372 = scmp.eq.s32.totalorder %s29, 0
        %p373 = pnand %p371, %p372
        %p374 = pneg %p373
        // Predicated region
        $region45: #{tpu_custom_call.1} parent=39 // pred_check
          _
        $region46: #{tpu_custom_call.1} parent=39 // pred_check_branch
          %376 = sbr.rel (%p373) target = $region48
        $region47: #{tpu_custom_call.1} parent=39 // pred_region
          %v377 = vld [vmem:[%s356] sm:$0xf]
          %v378 = vld [vmem:[%s356 + $0x4] sm:$0xf]
          %v379 = vld [vmem:[%s356 + $0x8] sm:$0xf]
          %v380 = vld [vmem:[%s356 + $0xc] sm:$0xf]
          %v381 = vld [vmem:[%s356 + $0x10] sm:$0xf]
          %v382 = vld [vmem:[%s356 + $0x14] sm:$0xf]
          %v383 = vld [vmem:[%s356 + $0x18] sm:$0xf]
          %v384 = vld [vmem:[%s356 + $0x1c] sm:$0xf]
          %v385 = vld [vmem:[%s356 + $0x20] sm:$0xf]
          %v386 = vld [vmem:[%s356 + $0x24] sm:$0xf]
          %387 = vst [vmem:[#allocation2] sm:$0xf] %v377
          %388 = vst [vmem:[#allocation2 + $0x4] sm:$0xf] %v378
          %389 = vst [vmem:[#allocation2 + $0x8] sm:$0xf] %v379
          %390 = vst [vmem:[#allocation2 + $0xc] sm:$0xf] %v380
          %391 = vst [vmem:[#allocation2 + $0x10] sm:$0xf] %v381
          %392 = vst [vmem:[#allocation2 + $0x14] sm:$0xf] %v382
          %393 = vst [vmem:[#allocation2 + $0x18] sm:$0xf] %v383
          %394 = vst [vmem:[#allocation2 + $0x1c] sm:$0xf] %v384
          %395 = vst [vmem:[#allocation2 + $0x20] sm:$0xf] %v385
          %396 = vst [vmem:[#allocation2 + $0x24] sm:$0xf] %v386
        $region48: #{tpu_custom_call.1} parent=39 // pred_fallthru
          _
        %p397 = scmp.eq.s32.totalorder %s28, 1
        %p398 = pnand %p397, %p372
        %p399 = pneg %p398
        // Predicated region
        $region49: #{tpu_custom_call.1} parent=39 // pred_check
          _
        $region50: #{tpu_custom_call.1} parent=39 // pred_check_branch
          %401 = sbr.rel (%p398) target = $region52
        $region51: #{tpu_custom_call.1} parent=39 // pred_region
          %v402 = vld [vmem:[#allocation3] sm:$0xff]
          %v403 = vld [vmem:[#allocation3 + $0x8] sm:$0xff]
          %v404 = vld [vmem:[#allocation3 + $0x10] sm:$0xff]
          %v405 = vld [vmem:[#allocation3 + $0x18] sm:$0xff]
          %v406 = vld [vmem:[#allocation3 + $0x20] sm:$0xff]
          %v407 = vld [vmem:[#allocation3 + $0x28] sm:$0xff]
          %v408 = vld [vmem:[#allocation3 + $0x30] sm:$0xff]
          %v409 = vld [vmem:[#allocation3 + $0x38] sm:$0xff]
          %v410 = vld [vmem:[#allocation3 + $0x40] sm:$0xff]
          %v411 = vld [vmem:[#allocation3 + $0x48] sm:$0xff]
          %v412 = vpack.c.bf16 %v402, %v402
          %v413 = vpack.c.bf16 %v403, %v403
          %v414 = vpack.c.bf16 %v404, %v404
          %v415 = vpack.c.bf16 %v405, %v405
          %v416 = vpack.c.bf16 %v406, %v406
          %v417 = vpack.c.bf16 %v407, %v407
          %v418 = vpack.c.bf16 %v408, %v408
          %v419 = vpack.c.bf16 %v409, %v409
          %v420 = vpack.c.bf16 %v410, %v410
          %v421 = vpack.c.bf16 %v411, %v411
          %422 = vst [vmem:[#allocation2] sm:$0xf] %v412
          %423 = vst [vmem:[#allocation2 + $0x4] sm:$0xf] %v413
          %424 = vst [vmem:[#allocation2 + $0x8] sm:$0xf] %v414
          %425 = vst [vmem:[#allocation2 + $0xc] sm:$0xf] %v415
          %426 = vst [vmem:[#allocation2 + $0x10] sm:$0xf] %v416
          %427 = vst [vmem:[#allocation2 + $0x14] sm:$0xf] %v417
          %428 = vst [vmem:[#allocation2 + $0x18] sm:$0xf] %v418
          %429 = vst [vmem:[#allocation2 + $0x1c] sm:$0xf] %v419
          %430 = vst [vmem:[#allocation2 + $0x20] sm:$0xf] %v420
          %431 = vst [vmem:[#allocation2 + $0x24] sm:$0xf] %v421
        $region52: #{tpu_custom_call.1} parent=39 // pred_fallthru
          _
        %v432 = vld [vmem:[%s350] sm:$0xf]
        %v433 = vld [vmem:[%s350 + $0x4] sm:$0xf]
        %v434 = vld [vmem:[%s350 + $0x8] sm:$0xf]
        %v435 = vld [vmem:[%s350 + $0xc] sm:$0xf]
        %v436 = vld [vmem:[%s350 + $0x10] sm:$0xf]
        %v437 = vld [vmem:[%s350 + $0x14] sm:$0xf]
        %v438 = vld [vmem:[%s350 + $0x18] sm:$0xf]
        %v439 = vld [vmem:[%s350 + $0x1c] sm:$0xf]
        %v440 = vld [vmem:[%s350 + $0x20] sm:$0xf]
        %v441 = vld [vmem:[%s350 + $0x24] sm:$0xf]
        %v442 = vld [vmem:[%s365] sm:$0xff]
        %v443 = vld [vmem:[%s365 + $0x8] sm:$0xff]
        %v444 = vld [vmem:[%s365 + $0x10] sm:$0xff]
        %v445 = vld [vmem:[%s365 + $0x18] sm:$0xff]
        %v446 = vld [vmem:[%s365 + $0x20] sm:$0xff]
        %v447 = vld [vmem:[%s365 + $0x28] sm:$0xff]
        %v448 = vld [vmem:[%s365 + $0x30] sm:$0xff]
        %v449 = vld [vmem:[%s365 + $0x38] sm:$0xff]
        %v450 = vld [vmem:[%s365 + $0x40] sm:$0xff]
        %v451 = vld [vmem:[%s365 + $0x48] sm:$0xff]
        %v452 = vld [vmem:[#allocation2] sm:$0xf]
        %v453 = vld [vmem:[#allocation2 + $0x4] sm:$0xf]
        %v454 = vld [vmem:[#allocation2 + $0x8] sm:$0xf]
        %v455 = vld [vmem:[#allocation2 + $0xc] sm:$0xf]
        %v456 = vld [vmem:[#allocation2 + $0x10] sm:$0xf]
        %v457 = vld [vmem:[#allocation2 + $0x14] sm:$0xf]
        %v458 = vld [vmem:[#allocation2 + $0x18] sm:$0xf]
        %v459 = vld [vmem:[#allocation2 + $0x1c] sm:$0xf]
        %v460 = vld [vmem:[#allocation2 + $0x20] sm:$0xf]
        %v461 = vld [vmem:[#allocation2 + $0x24] sm:$0xf]
        %v472 = vunpack.c.l.b16 %v432
        %v473 = vunpack.c.l.b16 %v433
        %v474 = vunpack.c.l.b16 %v434
        %v475 = vunpack.c.l.b16 %v435
        %v476 = vunpack.c.l.b16 %v436
        %v477 = vunpack.c.l.b16 %v437
        %v478 = vunpack.c.l.b16 %v438
        %v479 = vunpack.c.l.b16 %v439
        %v480 = vunpack.c.l.b16 %v440
        %v481 = vunpack.c.l.b16 %v441
        %v482 = vpack.c.b16 %v473, %v472
        %v483 = vpack.c.b16 %v475, %v474
        %v484 = vpack.c.b16 %v477, %v476
        %v485 = vpack.c.b16 %v479, %v478
        %v486 = vpack.c.b16 %v481, %v480
        %v497 = vunpack.c.l.b16 %v452
        %v498 = vunpack.c.l.b16 %v453
        %v499 = vunpack.c.l.b16 %v454
        %v500 = vunpack.c.l.b16 %v455
        %v501 = vunpack.c.l.b16 %v456
        %v502 = vunpack.c.l.b16 %v457
        %v503 = vunpack.c.l.b16 %v458
        %v504 = vunpack.c.l.b16 %v459
        %v505 = vunpack.c.l.b16 %v460
        %v506 = vunpack.c.l.b16 %v461
        %v507 = vpack.c.b16 %v498, %v497
        %v508 = vpack.c.b16 %v500, %v499
        %v509 = vpack.c.b16 %v502, %v501
        %v510 = vpack.c.b16 %v504, %v503
        %v511 = vpack.c.b16 %v506, %v505
        %vm517 = vcmask 654336
        %v519 = vsel %vm517, %v482, 0
        %v522 = vsel %vm517, %v483, 0
        %v525 = vsel %vm517, %v484, 0
        %v528 = vsel %vm517, %v485, 0
        %v531 = vsel %vm517, %v486, 0
        %533 = vmatpush.bf16.msra.mxu0 0
        %534 = vmatpush.bf16.msra.mxu0 0
        %535 = vmatpush.bf16.msra.mxu0 0
        %536 = vmatpush.bf16.msra.mxu0 %v511
        %537 = vmatpush.bf16.msra.mxu0 %v510
        %538 = vmatpush.bf16.msra.mxu0 %v509
        %539 = vmatpush.bf16.msra.mxu0 %v508
        %540 = vmatpush.bf16.msra.mxu0 %v507
        %541 = vmatmul.bf16.gmra.mxu0 %v519
        %v542 = vpop.f32.mrf.mxu0
        %v543 = vadd.f32 0.0, %v542
        %v544 = vpop.f32.mrf.mxu0
        %v545 = vadd.f32 0.0, %v544
        %546 = vmatmul.bf16.gmra.mxu0 %v522
        %v547 = vpop.f32.mrf.mxu0
        %v548 = vadd.f32 0.0, %v547
        %v549 = vpop.f32.mrf.mxu0
        %v550 = vadd.f32 0.0, %v549
        %551 = vmatmul.bf16.gmra.mxu0 %v525
        %v552 = vpop.f32.mrf.mxu0
        %v553 = vadd.f32 0.0, %v552
        %v554 = vpop.f32.mrf.mxu0
        %v555 = vadd.f32 0.0, %v554
        %556 = vmatmul.bf16.gmra.mxu0 %v528
        %v557 = vpop.f32.mrf.mxu0
        %v558 = vadd.f32 0.0, %v557
        %v559 = vpop.f32.mrf.mxu0
        %v560 = vadd.f32 0.0, %v559
        %561 = vmatmul.bf16.gmra.mxu0 %v531
        %v562 = vpop.f32.mrf.mxu0
        %v563 = vadd.f32 0.0, %v562
        %v564 = vpop.f32.mrf.mxu0
        %v565 = vadd.f32 0.0, %v564
        %566 = vdwg.mxu0
        %568 = vset.pattern.permute.xlu0 0
        %569 = vperm.xlu0 %568, %v442
        %v570 = vpop.permute.xlu0 %569
        %573 = vset.pattern.permute.xlu0 0
        %574 = vperm.xlu0 %573, %v443
        %v575 = vpop.permute.xlu0 %574
        %578 = vset.pattern.permute.xlu0 0
        %579 = vperm.xlu0 %578, %v444
        %v580 = vpop.permute.xlu0 %579
        %583 = vset.pattern.permute.xlu0 0
        %584 = vperm.xlu0 %583, %v445
        %v585 = vpop.permute.xlu0 %584
        %588 = vset.pattern.permute.xlu0 0
        %589 = vperm.xlu0 %588, %v446
        %v590 = vpop.permute.xlu0 %589
        %593 = vset.pattern.permute.xlu0 0
        %594 = vperm.xlu0 %593, %v447
        %v595 = vpop.permute.xlu0 %594
        %598 = vset.pattern.permute.xlu0 0
        %599 = vperm.xlu0 %598, %v448
        %v600 = vpop.permute.xlu0 %599
        %603 = vset.pattern.permute.xlu0 0
        %604 = vperm.xlu0 %603, %v449
        %v605 = vpop.permute.xlu0 %604
        %608 = vset.pattern.permute.xlu0 0
        %609 = vperm.xlu0 %608, %v450
        %v610 = vpop.permute.xlu0 %609
        %613 = vset.pattern.permute.xlu0 0
        %614 = vperm.xlu0 %613, %v451
        %v615 = vpop.permute.xlu0 %614
        %v617 = vmul.f32 %v543, %v570
        %v618 = vmul.f32 %v545, %v575
        %v619 = vmul.f32 %v548, %v580
        %v620 = vmul.f32 %v550, %v585
        %v621 = vmul.f32 %v553, %v590
        %v622 = vmul.f32 %v555, %v595
        %v623 = vmul.f32 %v558, %v600
        %v624 = vmul.f32 %v560, %v605
        %v625 = vmul.f32 %v563, %v610
        %v626 = vmul.f32 %v565, %v615
        %s627 = smul.u32 %s29, 80
        %s628 = sshra.s32 %s627, 3
        %s629 = sand.u32 %s627, 7
        %s630 = smul.addr %s628, 4
        %s631 = scalar_lea.vmem [#allocation2], %s630
        %v632 = vld [vmem:[%s631] sm:$0xf]
        %v633 = vld [vmem:[%s631 + $0x4] sm:$0xf]
        %v634 = vld [vmem:[%s631 + $0x8] sm:$0xf]
        %v635 = vld [vmem:[%s631 + $0xc] sm:$0xf]
        %v636 = vld [vmem:[%s631 + $0x10] sm:$0xf]
        %v637 = vld [vmem:[%s631 + $0x14] sm:$0xf]
        %v638 = vld [vmem:[%s631 + $0x18] sm:$0xf]
        %v639 = vld [vmem:[%s631 + $0x1c] sm:$0xf]
        %v640 = vld [vmem:[%s631 + $0x20] sm:$0xf]
        %v641 = vld [vmem:[%s631 + $0x24] sm:$0xf]
        %v642 = vpack.c.bf16 %v617, %v617
        %v643 = vpack.c.bf16 %v618, %v618
        %v644 = vpack.c.bf16 %v619, %v619
        %v645 = vpack.c.bf16 %v620, %v620
        %v646 = vpack.c.bf16 %v621, %v621
        %v647 = vpack.c.bf16 %v622, %v622
        %v648 = vpack.c.bf16 %v623, %v623
        %v649 = vpack.c.bf16 %v624, %v624
        %v650 = vpack.c.bf16 %v625, %v625
        %v651 = vpack.c.bf16 %v626, %v626
        %v662 = vunpack.c.l.b16 %v632
        %v663 = vunpack.c.l.b16 %v633
        %v664 = vunpack.c.l.b16 %v634
        %v665 = vunpack.c.l.b16 %v635
        %v666 = vunpack.c.l.b16 %v636
        %v667 = vunpack.c.l.b16 %v637
        %v668 = vunpack.c.l.b16 %v638
        %v669 = vunpack.c.l.b16 %v639
        %v670 = vunpack.c.l.b16 %v640
        %v671 = vunpack.c.l.b16 %v641
        %v672 = vpack.c.b16 %v663, %v662
        %v673 = vpack.c.b16 %v665, %v664
        %v674 = vpack.c.b16 %v667, %v666
        %v675 = vpack.c.b16 %v669, %v668
        %v676 = vpack.c.b16 %v671, %v670
        %v692 = vunpack.c.l.b16 %v642
        %v693 = vunpack.c.l.b16 %v643
        %v694 = vunpack.c.l.b16 %v644
        %v695 = vunpack.c.l.b16 %v645
        %v696 = vunpack.c.l.b16 %v646
        %v697 = vunpack.c.l.b16 %v647
        %v698 = vunpack.c.l.b16 %v648
        %v699 = vunpack.c.l.b16 %v649
        %v700 = vunpack.c.l.b16 %v650
        %v701 = vunpack.c.l.b16 %v651
        %v702 = vpack.c.b16 %v693, %v692
        %v703 = vpack.c.b16 %v695, %v694
        %v704 = vpack.c.b16 %v697, %v696
        %v705 = vpack.c.b16 %v699, %v698
        %v706 = vpack.c.b16 %v701, %v700
        %v712 = vld [vmem:[%s288] sm:$0xf]
        %v713 = vld [vmem:[%s288 + $0x4] sm:$0xf]
        %v714 = vld [vmem:[%s288 + $0x8] sm:$0xf]
        %v715 = vld [vmem:[%s288 + $0xc] sm:$0xf]
        %v716 = vld [vmem:[%s288 + $0x10] sm:$0xf]
        %v717 = vld [vmem:[%s288 + $0x14] sm:$0xf]
        %v718 = vld [vmem:[%s288 + $0x18] sm:$0xf]
        %v719 = vld [vmem:[%s288 + $0x1c] sm:$0xf]
        %v720 = vld [vmem:[%s288 + $0x20] sm:$0xf]
        %v721 = vld [vmem:[%s288 + $0x24] sm:$0xf]
        %v722 = vld [vmem:[%s288 + $0x28] sm:$0xf]
        %v723 = vld [vmem:[%s288 + $0x2c] sm:$0xf]
        %v724 = vld [vmem:[%s288 + $0x30] sm:$0xf]
        %v725 = vld [vmem:[%s288 + $0x34] sm:$0xf]
        %v726 = vld [vmem:[%s288 + $0x38] sm:$0xf]
        %v727 = vld [vmem:[%s288 + $0x3c] sm:$0xf]
        %v728 = vld [vmem:[%s288 + $0x40] sm:$0xf]
        %v729 = vld [vmem:[%s288 + $0x44] sm:$0xf]
        %v730 = vld [vmem:[%s288 + $0x48] sm:$0xf]
        %v731 = vld [vmem:[%s288 + $0x4c] sm:$0xf]
        %v732 = vld [vmem:[%s288 + $0x50] sm:$0xf]
        %v733 = vld [vmem:[%s288 + $0x54] sm:$0xf]
        %v734 = vld [vmem:[%s288 + $0x58] sm:$0xf]
        %v735 = vld [vmem:[%s288 + $0x5c] sm:$0xf]
        %v736 = vld [vmem:[%s288 + $0x60] sm:$0xf]
        %v737 = vld [vmem:[%s288 + $0x64] sm:$0xf]
        %v738 = vld [vmem:[%s288 + $0x68] sm:$0xf]
        %v739 = vld [vmem:[%s288 + $0x6c] sm:$0xf]
        %v740 = vld [vmem:[%s288 + $0x70] sm:$0xf]
        %v741 = vld [vmem:[%s288 + $0x74] sm:$0xf]
        %v742 = vld [vmem:[%s288 + $0x78] sm:$0xf]
        %v743 = vld [vmem:[%s288 + $0x7c] sm:$0xf]
        %v744 = vld [vmem:[%s369] sm:$0x1]
        %v746 = vperm.slane %v744, 0
        %v780 = vunpack.c.l.b16 %v712
        %v781 = vunpack.c.l.b16 %v713
        %v782 = vunpack.c.l.b16 %v714
        %v783 = vunpack.c.l.b16 %v715
        %v784 = vunpack.c.l.b16 %v716
        %v785 = vunpack.c.l.b16 %v717
        %v786 = vunpack.c.l.b16 %v718
        %v787 = vunpack.c.l.b16 %v719
        %v788 = vunpack.c.l.b16 %v720
        %v789 = vunpack.c.l.b16 %v721
        %v790 = vunpack.c.l.b16 %v722
        %v791 = vunpack.c.l.b16 %v723
        %v792 = vunpack.c.l.b16 %v724
        %v793 = vunpack.c.l.b16 %v725
        %v794 = vunpack.c.l.b16 %v726
        %v795 = vunpack.c.l.b16 %v727
        %v796 = vunpack.c.l.b16 %v728
        %v797 = vunpack.c.l.b16 %v729
        %v798 = vunpack.c.l.b16 %v730
        %v799 = vunpack.c.l.b16 %v731
        %v800 = vunpack.c.l.b16 %v732
        %v801 = vunpack.c.l.b16 %v733
        %v802 = vunpack.c.l.b16 %v734
        %v803 = vunpack.c.l.b16 %v735
        %v804 = vunpack.c.l.b16 %v736
        %v805 = vunpack.c.l.b16 %v737
        %v806 = vunpack.c.l.b16 %v738
        %v807 = vunpack.c.l.b16 %v739
        %v808 = vunpack.c.l.b16 %v740
        %v809 = vunpack.c.l.b16 %v741
        %v810 = vunpack.c.l.b16 %v742
        %v811 = vunpack.c.l.b16 %v743
        %v812 = vpack.c.b16 %v781, %v780
        %v813 = vpack.c.b16 %v783, %v782
        %v814 = vpack.c.b16 %v785, %v784
        %v815 = vpack.c.b16 %v787, %v786
        %v816 = vpack.c.b16 %v789, %v788
        %v817 = vpack.c.b16 %v791, %v790
        %v818 = vpack.c.b16 %v793, %v792
        %v819 = vpack.c.b16 %v795, %v794
        %v820 = vpack.c.b16 %v797, %v796
        %v821 = vpack.c.b16 %v799, %v798
        %v822 = vpack.c.b16 %v801, %v800
        %v823 = vpack.c.b16 %v803, %v802
        %v824 = vpack.c.b16 %v805, %v804
        %v825 = vpack.c.b16 %v807, %v806
        %v826 = vpack.c.b16 %v809, %v808
        %v827 = vpack.c.b16 %v811, %v810
        %844 = vmatpush.bf16.msra.mxu0 %v819
        %845 = vmatpush.bf16.msra.mxu0 %v818
        %846 = vmatpush.bf16.msra.mxu0 %v817
        %847 = vmatpush.bf16.msra.mxu0 %v816
        %848 = vmatpush.bf16.msra.mxu0 %v815
        %849 = vmatpush.bf16.msra.mxu0 %v814
        %850 = vmatpush.bf16.msra.mxu0 %v813
        %851 = vmatpush.bf16.msra.mxu0 %v812
        %852 = vmatmul.bf16.gmra.mxu0 %v672
        %v853 = vpop.f32.mrf.mxu0
        %v854 = vadd.f32 %v746, %v853
        %v855 = vpop.f32.mrf.mxu0
        %v856 = vadd.f32 %v746, %v855
        %857 = vmatmul.bf16.gmra.mxu0 %v673
        %v858 = vpop.f32.mrf.mxu0
        %v859 = vadd.f32 %v746, %v858
        %v860 = vpop.f32.mrf.mxu0
        %v861 = vadd.f32 %v746, %v860
        %862 = vmatmul.bf16.gmra.mxu0 %v674
        %v863 = vpop.f32.mrf.mxu0
        %v864 = vadd.f32 %v746, %v863
        %v865 = vpop.f32.mrf.mxu0
        %v866 = vadd.f32 %v746, %v865
        %867 = vmatmul.bf16.gmra.mxu0 %v675
        %v868 = vpop.f32.mrf.mxu0
        %v869 = vadd.f32 %v746, %v868
        %v870 = vpop.f32.mrf.mxu0
        %v871 = vadd.f32 %v746, %v870
        %872 = vmatmul.bf16.gmra.mxu0 %v676
        %v873 = vpop.f32.mrf.mxu0
        %v874 = vadd.f32 %v746, %v873
        %v875 = vpop.f32.mrf.mxu0
        %v876 = vadd.f32 %v746, %v875
        %877 = vdwg.mxu0
        %878 = vmatpush.bf16.msra.mxu0 %v827
        %879 = vmatpush.bf16.msra.mxu0 %v826
        %880 = vmatpush.bf16.msra.mxu0 %v825
        %881 = vmatpush.bf16.msra.mxu0 %v824
        %882 = vmatpush.bf16.msra.mxu0 %v823
        %883 = vmatpush.bf16.msra.mxu0 %v822
        %884 = vmatpush.bf16.msra.mxu0 %v821
        %885 = vmatpush.bf16.msra.mxu0 %v820
        %886 = vmatmul.bf16.gmra.mxu0 %v702
        %v887 = vpop.f32.mrf.mxu0
        %v888 = vadd.f32 %v854, %v887
        %v889 = vpop.f32.mrf.mxu0
        %v890 = vadd.f32 %v856, %v889
        %891 = vmatmul.bf16.gmra.mxu0 %v703
        %v892 = vpop.f32.mrf.mxu0
        %v893 = vadd.f32 %v859, %v892
        %v894 = vpop.f32.mrf.mxu0
        %v895 = vadd.f32 %v861, %v894
        %896 = vmatmul.bf16.gmra.mxu0 %v704
        %v897 = vpop.f32.mrf.mxu0
        %v898 = vadd.f32 %v864, %v897
        %v899 = vpop.f32.mrf.mxu0
        %v900 = vadd.f32 %v866, %v899
        %901 = vmatmul.bf16.gmra.mxu0 %v705
        %v902 = vpop.f32.mrf.mxu0
        %v903 = vadd.f32 %v869, %v902
        %v904 = vpop.f32.mrf.mxu0
        %v905 = vadd.f32 %v871, %v904
        %906 = vmatmul.bf16.gmra.mxu0 %v706
        %v907 = vpop.f32.mrf.mxu0
        %v908 = vadd.f32 %v874, %v907
        %v909 = vpop.f32.mrf.mxu0
        %v910 = vadd.f32 %v876, %v909
        %911 = vdwg.mxu0
        %v912 = vmax.f32 %v888, 0.0
        %v913 = vmax.f32 %v890, 0.0
        %v914 = vmax.f32 %v893, 0.0
        %v915 = vmax.f32 %v895, 0.0
        %v916 = vmax.f32 %v898, 0.0
        %v917 = vmax.f32 %v900, 0.0
        %v918 = vmax.f32 %v903, 0.0
        %v919 = vmax.f32 %v905, 0.0
        %v920 = vmax.f32 %v908, 0.0
        %v921 = vmax.f32 %v910, 0.0
        %s922 = scalar_lea.vmem [#allocation3], %s627
        %923 = vst [vmem:[%s922] sm:$0xff] %v912
        %924 = vst [vmem:[%s922 + $0x8] sm:$0xff] %v913
        %925 = vst [vmem:[%s922 + $0x10] sm:$0xff] %v914
        %926 = vst [vmem:[%s922 + $0x18] sm:$0xff] %v915
        %927 = vst [vmem:[%s922 + $0x20] sm:$0xff] %v916
        %928 = vst [vmem:[%s922 + $0x28] sm:$0xff] %v917
        %929 = vst [vmem:[%s922 + $0x30] sm:$0xff] %v918
        %930 = vst [vmem:[%s922 + $0x38] sm:$0xff] %v919
        %931 = vst [vmem:[%s922 + $0x40] sm:$0xff] %v920
        %932 = vst [vmem:[%s922 + $0x48] sm:$0xff] %v921
        // Predicated region
        $region53: #{tpu_custom_call.1} parent=39 // pred_check
          _
        $region54: #{tpu_custom_call.1} parent=39 // pred_check_branch
          %934 = sbr.rel (%p398) target = $region56
        $region55: #{tpu_custom_call.1} parent=39 // pred_region
          %v935 = vld [vmem:[#allocation3] sm:$0xff]
          %v936 = vld [vmem:[#allocation3 + $0x8] sm:$0xff]
          %v937 = vld [vmem:[#allocation3 + $0x10] sm:$0xff]
          %v938 = vld [vmem:[#allocation3 + $0x18] sm:$0xff]
          %v939 = vld [vmem:[#allocation3 + $0x20] sm:$0xff]
          %v940 = vld [vmem:[#allocation3 + $0x28] sm:$0xff]
          %v941 = vld [vmem:[#allocation3 + $0x30] sm:$0xff]
          %v942 = vld [vmem:[#allocation3 + $0x38] sm:$0xff]
          %v943 = vld [vmem:[#allocation3 + $0x40] sm:$0xff]
          %v944 = vld [vmem:[#allocation3 + $0x48] sm:$0xff]
          %v946 = vrot.slane %v935, 1
          %v947 = vrot.slane %v935, 2
          %v948 = vrot.slane %v935, 3
          %v949 = vrot.slane %v935, 4
          %v950 = vrot.slane %v935, 5
          %v951 = vrot.slane %v935, 6
          %v952 = vrot.slane %v935, 7
          %v961 = vrot.slane %v936, 1
          %v962 = vrot.slane %v936, 2
          %v963 = vrot.slane %v936, 3
          %v964 = vrot.slane %v936, 4
          %v965 = vrot.slane %v936, 5
          %v966 = vrot.slane %v936, 6
          %v967 = vrot.slane %v936, 7
          %v975 = vperm.slane %v936, 0
          %v976 = vperm.slane %v961, 0
          %v977 = vperm.slane %v962, 0
          %v978 = vperm.slane %v963, 0
          %v979 = vperm.slane %v964, 0
          %v980 = vperm.slane %v965, 0
          %v981 = vperm.slane %v966, 0
          %v982 = vperm.slane %v967, 0
          %v991 = vadd.f32 %v975, %v937
          %v992 = vadd.f32 %v976, %v938
          %v993 = vadd.f32 %v977, %v939
          %v994 = vadd.f32 %v978, %v940
          %v995 = vadd.f32 %v979, %v941
          %v996 = vadd.f32 %v980, %v942
          %v997 = vadd.f32 %v981, %v943
          %v998 = vadd.f32 %v982, %v944
          %v999 = vmul.f32 %v991, 0.5
          %v1000 = vmul.f32 %v992, 0.5
          %v1001 = vmul.f32 %v993, 0.5
          %v1002 = vmul.f32 %v994, 0.5
          %v1003 = vmul.f32 %v995, 0.5
          %v1004 = vmul.f32 %v996, 0.5
          %v1005 = vmul.f32 %v997, 0.5
          %v1006 = vmul.f32 %v998, 0.5
          %v1007 = vmul.f32 %v935, %v935
          %v1008 = vmul.f32 %v946, %v946
          %v1009 = vmul.f32 %v947, %v947
          %v1010 = vmul.f32 %v948, %v948
          %v1011 = vmul.f32 %v949, %v949
          %v1012 = vmul.f32 %v950, %v950
          %v1013 = vmul.f32 %v951, %v951
          %v1014 = vmul.f32 %v952, %v952
          %vm1015 = vcmask 1040384
          %v1016 = vsel %vm1015, %v1007, 0.0
          %1017 = vadd.xlane.f32.xlu0 %v1016
          %v1018 = vpop.xlane.xlu0 %1017
          %v1019 = vsel %vm1015, %v1008, 0.0
          %1020 = vadd.xlane.f32.xlu0 %v1019
          %v1021 = vpop.xlane.xlu0 %1020
          %v1022 = vsel %vm1015, %v1009, 0.0
          %1023 = vadd.xlane.f32.xlu0 %v1022
          %v1024 = vpop.xlane.xlu0 %1023
          %v1025 = vsel %vm1015, %v1010, 0.0
          %1026 = vadd.xlane.f32.xlu0 %v1025
          %v1027 = vpop.xlane.xlu0 %1026
          %v1028 = vsel %vm1015, %v1011, 0.0
          %1029 = vadd.xlane.f32.xlu0 %v1028
          %v1030 = vpop.xlane.xlu0 %1029
          %v1031 = vsel %vm1015, %v1012, 0.0
          %1032 = vadd.xlane.f32.xlu0 %v1031
          %v1033 = vpop.xlane.xlu0 %1032
          %v1034 = vsel %vm1015, %v1013, 0.0
          %1035 = vadd.xlane.f32.xlu0 %v1034
          %v1036 = vpop.xlane.xlu0 %1035
          %v1037 = vsel %vm1015, %v1014, 0.0
          %1038 = vadd.xlane.f32.xlu0 %v1037
          %v1039 = vpop.xlane.xlu0 %1038
          %v1040 = vadd.f32 %v1018, 1e-12
          %v1041 = vadd.f32 %v1021, 1e-12
          %v1042 = vadd.f32 %v1024, 1e-12
          %v1043 = vadd.f32 %v1027, 1e-12
          %v1044 = vadd.f32 %v1030, 1e-12
          %v1045 = vadd.f32 %v1033, 1e-12
          %v1046 = vadd.f32 %v1036, 1e-12
          %v1047 = vadd.f32 %v1039, 1e-12
          %v1048 = vrsqrt.pop %v1040
          %v1049 = vmul.f32 %v1048, %v1040
          %v1050 = vmul.f32 %v1049, %v1048
          %v1051 = vmul.f32 0.5, %v1050
          %v1052 = vsub.f32 1.5, %v1051
          %v1053 = vmul.f32 %v1048, %v1052
          %vm1054 = vweird.f32 %v1040
          %vm1055 = vweird.f32 %v1048
          %vm1056 = vmor %vm1054, %vm1055
          %v1057 = vsel %vm1056, %v1048, %v1053
          %v1058 = vrsqrt.pop %v1041
          %v1059 = vmul.f32 %v1058, %v1041
          %v1060 = vmul.f32 %v1059, %v1058
          %v1061 = vmul.f32 0.5, %v1060
          %v1062 = vsub.f32 1.5, %v1061
          %v1063 = vmul.f32 %v1058, %v1062
          %vm1064 = vweird.f32 %v1041
          %vm1065 = vweird.f32 %v1058
          %vm1066 = vmor %vm1064, %vm1065
          %v1067 = vsel %vm1066, %v1058, %v1063
          %v1068 = vrsqrt.pop %v1042
          %v1069 = vmul.f32 %v1068, %v1042
          %v1070 = vmul.f32 %v1069, %v1068
          %v1071 = vmul.f32 0.5, %v1070
          %v1072 = vsub.f32 1.5, %v1071
          %v1073 = vmul.f32 %v1068, %v1072
          %vm1074 = vweird.f32 %v1042
          %vm1075 = vweird.f32 %v1068
          %vm1076 = vmor %vm1074, %vm1075
          %v1077 = vsel %vm1076, %v1068, %v1073
          %v1078 = vrsqrt.pop %v1043
          %v1079 = vmul.f32 %v1078, %v1043
          %v1080 = vmul.f32 %v1079, %v1078
          %v1081 = vmul.f32 0.5, %v1080
          %v1082 = vsub.f32 1.5, %v1081
          %v1083 = vmul.f32 %v1078, %v1082
          %vm1084 = vweird.f32 %v1043
          %vm1085 = vweird.f32 %v1078
          %vm1086 = vmor %vm1084, %vm1085
          %v1087 = vsel %vm1086, %v1078, %v1083
          %v1088 = vrsqrt.pop %v1044
          %v1089 = vmul.f32 %v1088, %v1044
          %v1090 = vmul.f32 %v1089, %v1088
          %v1091 = vmul.f32 0.5, %v1090
          %v1092 = vsub.f32 1.5, %v1091
          %v1093 = vmul.f32 %v1088, %v1092
          %vm1094 = vweird.f32 %v1044
          %vm1095 = vweird.f32 %v1088
          %vm1096 = vmor %vm1094, %vm1095
          %v1097 = vsel %vm1096, %v1088, %v1093
          %v1098 = vrsqrt.pop %v1045
          %v1099 = vmul.f32 %v1098, %v1045
          %v1100 = vmul.f32 %v1099, %v1098
          %v1101 = vmul.f32 0.5, %v1100
          %v1102 = vsub.f32 1.5, %v1101
          %v1103 = vmul.f32 %v1098, %v1102
          %vm1104 = vweird.f32 %v1045
          %vm1105 = vweird.f32 %v1098
          %vm1106 = vmor %vm1104, %vm1105
          %v1107 = vsel %vm1106, %v1098, %v1103
          %v1108 = vrsqrt.pop %v1046
          %v1109 = vmul.f32 %v1108, %v1046
          %v1110 = vmul.f32 %v1109, %v1108
          %v1111 = vmul.f32 0.5, %v1110
          %v1112 = vsub.f32 1.5, %v1111
          %v1113 = vmul.f32 %v1108, %v1112
          %vm1114 = vweird.f32 %v1046
          %vm1115 = vweird.f32 %v1108
          %vm1116 = vmor %vm1114, %vm1115
          %v1117 = vsel %vm1116, %v1108, %v1113
          %v1118 = vrsqrt.pop %v1047
          %v1119 = vmul.f32 %v1118, %v1047
          %v1120 = vmul.f32 %v1119, %v1118
          %v1121 = vmul.f32 0.5, %v1120
          %v1122 = vsub.f32 1.5, %v1121
          %v1123 = vmul.f32 %v1118, %v1122
          %vm1124 = vweird.f32 %v1047
          %vm1125 = vweird.f32 %v1118
          %vm1126 = vmor %vm1124, %vm1125
          %v1127 = vsel %vm1126, %v1118, %v1123
          %v1128 = vmul.f32 %v935, %v1057
          %v1129 = vmul.f32 %v946, %v1067
          %v1130 = vmul.f32 %v947, %v1077
          %v1131 = vmul.f32 %v948, %v1087
          %v1132 = vmul.f32 %v949, %v1097
          %v1133 = vmul.f32 %v950, %v1107
          %v1134 = vmul.f32 %v951, %v1117
          %v1135 = vmul.f32 %v952, %v1127
          %v1136 = vmul.f32 %v999, %v999
          %v1137 = vmul.f32 %v1000, %v1000
          %v1138 = vmul.f32 %v1001, %v1001
          %v1139 = vmul.f32 %v1002, %v1002
          %v1140 = vmul.f32 %v1003, %v1003
          %v1141 = vmul.f32 %v1004, %v1004
          %v1142 = vmul.f32 %v1005, %v1005
          %v1143 = vmul.f32 %v1006, %v1006
          %1144 = vadd.xlane.f32.xlu0 %v1136
          %v1145 = vpop.xlane.xlu0 %1144
          %1146 = vadd.xlane.f32.xlu0 %v1137
          %v1147 = vpop.xlane.xlu0 %1146
          %1148 = vadd.xlane.f32.xlu0 %v1138
          %v1149 = vpop.xlane.xlu0 %1148
          %1150 = vadd.xlane.f32.xlu0 %v1139
          %v1151 = vpop.xlane.xlu0 %1150
          %1152 = vadd.xlane.f32.xlu0 %v1140
          %v1153 = vpop.xlane.xlu0 %1152
          %1154 = vadd.xlane.f32.xlu0 %v1141
          %v1155 = vpop.xlane.xlu0 %1154
          %1156 = vadd.xlane.f32.xlu0 %v1142
          %v1157 = vpop.xlane.xlu0 %1156
          %1158 = vadd.xlane.f32.xlu0 %v1143
          %v1159 = vpop.xlane.xlu0 %1158
          %v1160 = vadd.f32 %v1145, 1e-12
          %v1161 = vadd.f32 %v1147, 1e-12
          %v1162 = vadd.f32 %v1149, 1e-12
          %v1163 = vadd.f32 %v1151, 1e-12
          %v1164 = vadd.f32 %v1153, 1e-12
          %v1165 = vadd.f32 %v1155, 1e-12
          %v1166 = vadd.f32 %v1157, 1e-12
          %v1167 = vadd.f32 %v1159, 1e-12
          %v1168 = vrsqrt.pop %v1160
          %v1169 = vmul.f32 %v1168, %v1160
          %v1170 = vmul.f32 %v1169, %v1168
          %v1171 = vmul.f32 0.5, %v1170
          %v1172 = vsub.f32 1.5, %v1171
          %v1173 = vmul.f32 %v1168, %v1172
          %vm1174 = vweird.f32 %v1160
          %vm1175 = vweird.f32 %v1168
          %vm1176 = vmor %vm1174, %vm1175
          %v1177 = vsel %vm1176, %v1168, %v1173
          %v1178 = vrsqrt.pop %v1161
          %v1179 = vmul.f32 %v1178, %v1161
          %v1180 = vmul.f32 %v1179, %v1178
          %v1181 = vmul.f32 0.5, %v1180
          %v1182 = vsub.f32 1.5, %v1181
          %v1183 = vmul.f32 %v1178, %v1182
          %vm1184 = vweird.f32 %v1161
          %vm1185 = vweird.f32 %v1178
          %vm1186 = vmor %vm1184, %vm1185
          %v1187 = vsel %vm1186, %v1178, %v1183
          %v1188 = vrsqrt.pop %v1162
          %v1189 = vmul.f32 %v1188, %v1162
          %v1190 = vmul.f32 %v1189, %v1188
          %v1191 = vmul.f32 0.5, %v1190
          %v1192 = vsub.f32 1.5, %v1191
          %v1193 = vmul.f32 %v1188, %v1192
          %vm1194 = vweird.f32 %v1162
          %vm1195 = vweird.f32 %v1188
          %vm1196 = vmor %vm1194, %vm1195
          %v1197 = vsel %vm1196, %v1188, %v1193
          %v1198 = vrsqrt.pop %v1163
          %v1199 = vmul.f32 %v1198, %v1163
          %v1200 = vmul.f32 %v1199, %v1198
          %v1201 = vmul.f32 0.5, %v1200
          %v1202 = vsub.f32 1.5, %v1201
          %v1203 = vmul.f32 %v1198, %v1202
          %vm1204 = vweird.f32 %v1163
          %vm1205 = vweird.f32 %v1198
          %vm1206 = vmor %vm1204, %vm1205
          %v1207 = vsel %vm1206, %v1198, %v1203
          %v1208 = vrsqrt.pop %v1164
          %v1209 = vmul.f32 %v1208, %v1164
          %v1210 = vmul.f32 %v1209, %v1208
          %v1211 = vmul.f32 0.5, %v1210
          %v1212 = vsub.f32 1.5, %v1211
          %v1213 = vmul.f32 %v1208, %v1212
          %vm1214 = vweird.f32 %v1164
          %vm1215 = vweird.f32 %v1208
          %vm1216 = vmor %vm1214, %vm1215
          %v1217 = vsel %vm1216, %v1208, %v1213
          %v1218 = vrsqrt.pop %v1165
          %v1219 = vmul.f32 %v1218, %v1165
          %v1220 = vmul.f32 %v1219, %v1218
          %v1221 = vmul.f32 0.5, %v1220
          %v1222 = vsub.f32 1.5, %v1221
          %v1223 = vmul.f32 %v1218, %v1222
          %vm1224 = vweird.f32 %v1165
          %vm1225 = vweird.f32 %v1218
          %vm1226 = vmor %vm1224, %vm1225
          %v1227 = vsel %vm1226, %v1218, %v1223
          %v1228 = vrsqrt.pop %v1166
          %v1229 = vmul.f32 %v1228, %v1166
          %v1230 = vmul.f32 %v1229, %v1228
          %v1231 = vmul.f32 0.5, %v1230
          %v1232 = vsub.f32 1.5, %v1231
          %v1233 = vmul.f32 %v1228, %v1232
          %vm1234 = vweird.f32 %v1166
          %vm1235 = vweird.f32 %v1228
          %vm1236 = vmor %vm1234, %vm1235
          %v1237 = vsel %vm1236, %v1228, %v1233
          %v1238 = vrsqrt.pop %v1167
          %v1239 = vmul.f32 %v1238, %v1167
          %v1240 = vmul.f32 %v1239, %v1238
          %v1241 = vmul.f32 0.5, %v1240
          %v1242 = vsub.f32 1.5, %v1241
          %v1243 = vmul.f32 %v1238, %v1242
          %vm1244 = vweird.f32 %v1167
          %vm1245 = vweird.f32 %v1238
          %vm1246 = vmor %vm1244, %vm1245
          %v1247 = vsel %vm1246, %v1238, %v1243
          %v1248 = vmul.f32 %v999, %v1177
          %v1249 = vmul.f32 %v1000, %v1187
          %v1250 = vmul.f32 %v1001, %v1197
          %v1251 = vmul.f32 %v1002, %v1207
          %v1252 = vmul.f32 %v1003, %v1217
          %v1253 = vmul.f32 %v1004, %v1227
          %v1254 = vmul.f32 %v1005, %v1237
          %v1255 = vmul.f32 %v1006, %v1247
          %v1264 = vperm.slane %v1128, 0
          %v1265 = vperm.slane %v1129, 0
          %v1266 = vperm.slane %v1130, 0
          %v1267 = vperm.slane %v1131, 0
          %v1268 = vperm.slane %v1132, 0
          %v1269 = vperm.slane %v1133, 0
          %v1270 = vperm.slane %v1134, 0
          %v1271 = vperm.slane %v1135, 0
          %v1280 = vmul.f32 %v1264, %v1248
          %v1281 = vmul.f32 %v1265, %v1249
          %v1282 = vmul.f32 %v1266, %v1250
          %v1283 = vmul.f32 %v1267, %v1251
          %v1284 = vmul.f32 %v1268, %v1252
          %v1285 = vmul.f32 %v1269, %v1253
          %v1286 = vmul.f32 %v1270, %v1254
          %v1287 = vmul.f32 %v1271, %v1255
          %1288 = vadd.xlane.f32.xlu0 %v1280
          %v1289 = vpop.xlane.xlu0 %1288
          %1290 = vadd.xlane.f32.xlu0 %v1281
          %v1291 = vpop.xlane.xlu0 %1290
          %1292 = vadd.xlane.f32.xlu0 %v1282
          %v1293 = vpop.xlane.xlu0 %1292
          %1294 = vadd.xlane.f32.xlu0 %v1283
          %v1295 = vpop.xlane.xlu0 %1294
          %1296 = vadd.xlane.f32.xlu0 %v1284
          %v1297 = vpop.xlane.xlu0 %1296
          %1298 = vadd.xlane.f32.xlu0 %v1285
          %v1299 = vpop.xlane.xlu0 %1298
          %1300 = vadd.xlane.f32.xlu0 %v1286
          %v1301 = vpop.xlane.xlu0 %1300
          %1302 = vadd.xlane.f32.xlu0 %v1287
          %v1303 = vpop.xlane.xlu0 %1302
          %v1312 = vlaneseq
          %v1313 = vand.u32 %v1312, 127
          %v1314 = vperm.slane %v1289, %v1313
          %v1315 = vperm.slane %v1291, %v1313
          %v1316 = vperm.slane %v1293, %v1313
          %v1317 = vperm.slane %v1295, %v1313
          %v1318 = vperm.slane %v1297, %v1313
          %v1319 = vperm.slane %v1299, %v1313
          %v1320 = vperm.slane %v1301, %v1313
          %v1321 = vperm.slane %v1303, %v1313
          %vm1322 = vcmask 1041409
          %v1323 = vsel %vm1322, %v1315, %v1314
          %vm1324 = vcmask 1042434
          %v1325 = vsel %vm1324, %v1316, %v1323
          %vm1326 = vcmask 1043459
          %v1327 = vsel %vm1326, %v1317, %v1325
          %vm1328 = vcmask 1044484
          %v1329 = vsel %vm1328, %v1318, %v1327
          %vm1330 = vcmask 1045509
          %v1331 = vsel %vm1330, %v1319, %v1329
          %vm1332 = vcmask 1046534
          %v1333 = vsel %vm1332, %v1320, %v1331
          %vm1334 = vcmask 1047559
          %v1335 = vsel %vm1334, %v1321, %v1333
          %vm1337 = vcmask 64512
          %v1338 = vsel %vm1337, %v1335, 0.0
          %1339 = vadd.xlane.f32.xlu0 %v1338
          %v1340 = vpop.xlane.xlu0 %1339
          %v1341 = vperm.slane %v935, 0
          %v1342 = vperm.slane %v946, 0
          %v1343 = vperm.slane %v947, 0
          %v1344 = vperm.slane %v948, 0
          %v1345 = vperm.slane %v949, 0
          %v1346 = vperm.slane %v950, 0
          %v1347 = vperm.slane %v951, 0
          %v1348 = vperm.slane %v952, 0
          %v1357 = vadd.f32 %v1341, %v937
          %v1358 = vadd.f32 %v1342, %v938
          %v1359 = vadd.f32 %v1343, %v939
          %v1360 = vadd.f32 %v1344, %v940
          %v1361 = vadd.f32 %v1345, %v941
          %v1362 = vadd.f32 %v1346, %v942
          %v1363 = vadd.f32 %v1347, %v943
          %v1364 = vadd.f32 %v1348, %v944
          %v1365 = vmul.f32 %v1357, 0.5
          %v1366 = vmul.f32 %v1358, 0.5
          %v1367 = vmul.f32 %v1359, 0.5
          %v1368 = vmul.f32 %v1360, 0.5
          %v1369 = vmul.f32 %v1361, 0.5
          %v1370 = vmul.f32 %v1362, 0.5
          %v1371 = vmul.f32 %v1363, 0.5
          %v1372 = vmul.f32 %v1364, 0.5
          %v1373 = vmul.f32 %v936, %v936
          %v1374 = vmul.f32 %v961, %v961
          %v1375 = vmul.f32 %v962, %v962
          %v1376 = vmul.f32 %v963, %v963
          %v1377 = vmul.f32 %v964, %v964
          %v1378 = vmul.f32 %v965, %v965
          %v1379 = vmul.f32 %v966, %v966
          %v1380 = vmul.f32 %v967, %v967
          %v1381 = vsel %vm1015, %v1373, 0.0
          %1382 = vadd.xlane.f32.xlu0 %v1381
          %v1383 = vpop.xlane.xlu0 %1382
          %v1384 = vsel %vm1015, %v1374, 0.0
          %1385 = vadd.xlane.f32.xlu0 %v1384
          %v1386 = vpop.xlane.xlu0 %1385
          %v1387 = vsel %vm1015, %v1375, 0.0
          %1388 = vadd.xlane.f32.xlu0 %v1387
          %v1389 = vpop.xlane.xlu0 %1388
          %v1390 = vsel %vm1015, %v1376, 0.0
          %1391 = vadd.xlane.f32.xlu0 %v1390
          %v1392 = vpop.xlane.xlu0 %1391
          %v1393 = vsel %vm1015, %v1377, 0.0
          %1394 = vadd.xlane.f32.xlu0 %v1393
          %v1395 = vpop.xlane.xlu0 %1394
          %v1396 = vsel %vm1015, %v1378, 0.0
          %1397 = vadd.xlane.f32.xlu0 %v1396
          %v1398 = vpop.xlane.xlu0 %1397
          %v1399 = vsel %vm1015, %v1379, 0.0
          %1400 = vadd.xlane.f32.xlu0 %v1399
          %v1401 = vpop.xlane.xlu0 %1400
          %v1402 = vsel %vm1015, %v1380, 0.0
          %1403 = vadd.xlane.f32.xlu0 %v1402
          %v1404 = vpop.xlane.xlu0 %1403
          %v1405 = vadd.f32 %v1383, 1e-12
          %v1406 = vadd.f32 %v1386, 1e-12
          %v1407 = vadd.f32 %v1389, 1e-12
          %v1408 = vadd.f32 %v1392, 1e-12
          %v1409 = vadd.f32 %v1395, 1e-12
          %v1410 = vadd.f32 %v1398, 1e-12
          %v1411 = vadd.f32 %v1401, 1e-12
          %v1412 = vadd.f32 %v1404, 1e-12
          %v1413 = vrsqrt.pop %v1405
          %v1414 = vmul.f32 %v1413, %v1405
          %v1415 = vmul.f32 %v1414, %v1413
          %v1416 = vmul.f32 0.5, %v1415
          %v1417 = vsub.f32 1.5, %v1416
          %v1418 = vmul.f32 %v1413, %v1417
          %vm1419 = vweird.f32 %v1405
          %vm1420 = vweird.f32 %v1413
          %vm1421 = vmor %vm1419, %vm1420
          %v1422 = vsel %vm1421, %v1413, %v1418
          %v1423 = vrsqrt.pop %v1406
          %v1424 = vmul.f32 %v1423, %v1406
          %v1425 = vmul.f32 %v1424, %v1423
          %v1426 = vmul.f32 0.5, %v1425
          %v1427 = vsub.f32 1.5, %v1426
          %v1428 = vmul.f32 %v1423, %v1427
          %vm1429 = vweird.f32 %v1406
          %vm1430 = vweird.f32 %v1423
          %vm1431 = vmor %vm1429, %vm1430
          %v1432 = vsel %vm1431, %v1423, %v1428
          %v1433 = vrsqrt.pop %v1407
          %v1434 = vmul.f32 %v1433, %v1407
          %v1435 = vmul.f32 %v1434, %v1433
          %v1436 = vmul.f32 0.5, %v1435
          %v1437 = vsub.f32 1.5, %v1436
          %v1438 = vmul.f32 %v1433, %v1437
          %vm1439 = vweird.f32 %v1407
          %vm1440 = vweird.f32 %v1433
          %vm1441 = vmor %vm1439, %vm1440
          %v1442 = vsel %vm1441, %v1433, %v1438
          %v1443 = vrsqrt.pop %v1408
          %v1444 = vmul.f32 %v1443, %v1408
          %v1445 = vmul.f32 %v1444, %v1443
          %v1446 = vmul.f32 0.5, %v1445
          %v1447 = vsub.f32 1.5, %v1446
          %v1448 = vmul.f32 %v1443, %v1447
          %vm1449 = vweird.f32 %v1408
          %vm1450 = vweird.f32 %v1443
          %vm1451 = vmor %vm1449, %vm1450
          %v1452 = vsel %vm1451, %v1443, %v1448
          %v1453 = vrsqrt.pop %v1409
          %v1454 = vmul.f32 %v1453, %v1409
          %v1455 = vmul.f32 %v1454, %v1453
          %v1456 = vmul.f32 0.5, %v1455
          %v1457 = vsub.f32 1.5, %v1456
          %v1458 = vmul.f32 %v1453, %v1457
          %vm1459 = vweird.f32 %v1409
          %vm1460 = vweird.f32 %v1453
          %vm1461 = vmor %vm1459, %vm1460
          %v1462 = vsel %vm1461, %v1453, %v1458
          %v1463 = vrsqrt.pop %v1410
          %v1464 = vmul.f32 %v1463, %v1410
          %v1465 = vmul.f32 %v1464, %v1463
          %v1466 = vmul.f32 0.5, %v1465
          %v1467 = vsub.f32 1.5, %v1466
          %v1468 = vmul.f32 %v1463, %v1467
          %vm1469 = vweird.f32 %v1410
          %vm1470 = vweird.f32 %v1463
          %vm1471 = vmor %vm1469, %vm1470
          %v1472 = vsel %vm1471, %v1463, %v1468
          %v1473 = vrsqrt.pop %v1411
          %v1474 = vmul.f32 %v1473, %v1411
          %v1475 = vmul.f32 %v1474, %v1473
          %v1476 = vmul.f32 0.5, %v1475
          %v1477 = vsub.f32 1.5, %v1476
          %v1478 = vmul.f32 %v1473, %v1477
          %vm1479 = vweird.f32 %v1411
          %vm1480 = vweird.f32 %v1473
          %vm1481 = vmor %vm1479, %vm1480
          %v1482 = vsel %vm1481, %v1473, %v1478
          %v1483 = vrsqrt.pop %v1412
          %v1484 = vmul.f32 %v1483, %v1412
          %v1485 = vmul.f32 %v1484, %v1483
          %v1486 = vmul.f32 0.5, %v1485
          %v1487 = vsub.f32 1.5, %v1486
          %v1488 = vmul.f32 %v1483, %v1487
          %vm1489 = vweird.f32 %v1412
          %vm1490 = vweird.f32 %v1483
          %vm1491 = vmor %vm1489, %vm1490
          %v1492 = vsel %vm1491, %v1483, %v1488
          %v1493 = vmul.f32 %v936, %v1422
          %v1494 = vmul.f32 %v961, %v1432
          %v1495 = vmul.f32 %v962, %v1442
          %v1496 = vmul.f32 %v963, %v1452
          %v1497 = vmul.f32 %v964, %v1462
          %v1498 = vmul.f32 %v965, %v1472
          %v1499 = vmul.f32 %v966, %v1482
          %v1500 = vmul.f32 %v967, %v1492
          %v1501 = vmul.f32 %v1365, %v1365
          %v1502 = vmul.f32 %v1366, %v1366
          %v1503 = vmul.f32 %v1367, %v1367
          %v1504 = vmul.f32 %v1368, %v1368
          %v1505 = vmul.f32 %v1369, %v1369
          %v1506 = vmul.f32 %v1370, %v1370
          %v1507 = vmul.f32 %v1371, %v1371
          %v1508 = vmul.f32 %v1372, %v1372
          %1509 = vadd.xlane.f32.xlu0 %v1501
          %v1510 = vpop.xlane.xlu0 %1509
          %1511 = vadd.xlane.f32.xlu0 %v1502
          %v1512 = vpop.xlane.xlu0 %1511
          %1513 = vadd.xlane.f32.xlu0 %v1503
          %v1514 = vpop.xlane.xlu0 %1513
          %1515 = vadd.xlane.f32.xlu0 %v1504
          %v1516 = vpop.xlane.xlu0 %1515
          %1517 = vadd.xlane.f32.xlu0 %v1505
          %v1518 = vpop.xlane.xlu0 %1517
          %1519 = vadd.xlane.f32.xlu0 %v1506
          %v1520 = vpop.xlane.xlu0 %1519
          %1521 = vadd.xlane.f32.xlu0 %v1507
          %v1522 = vpop.xlane.xlu0 %1521
          %1523 = vadd.xlane.f32.xlu0 %v1508
          %v1524 = vpop.xlane.xlu0 %1523
          %v1525 = vadd.f32 %v1510, 1e-12
          %v1526 = vadd.f32 %v1512, 1e-12
          %v1527 = vadd.f32 %v1514, 1e-12
          %v1528 = vadd.f32 %v1516, 1e-12
          %v1529 = vadd.f32 %v1518, 1e-12
          %v1530 = vadd.f32 %v1520, 1e-12
          %v1531 = vadd.f32 %v1522, 1e-12
          %v1532 = vadd.f32 %v1524, 1e-12
          %v1533 = vrsqrt.pop %v1525
          %v1534 = vmul.f32 %v1533, %v1525
          %v1535 = vmul.f32 %v1534, %v1533
          %v1536 = vmul.f32 0.5, %v1535
          %v1537 = vsub.f32 1.5, %v1536
          %v1538 = vmul.f32 %v1533, %v1537
          %vm1539 = vweird.f32 %v1525
          %vm1540 = vweird.f32 %v1533
          %vm1541 = vmor %vm1539, %vm1540
          %v1542 = vsel %vm1541, %v1533, %v1538
          %v1543 = vrsqrt.pop %v1526
          %v1544 = vmul.f32 %v1543, %v1526
          %v1545 = vmul.f32 %v1544, %v1543
          %v1546 = vmul.f32 0.5, %v1545
          %v1547 = vsub.f32 1.5, %v1546
          %v1548 = vmul.f32 %v1543, %v1547
          %vm1549 = vweird.f32 %v1526
          %vm1550 = vweird.f32 %v1543
          %vm1551 = vmor %vm1549, %vm1550
          %v1552 = vsel %vm1551, %v1543, %v1548
          %v1553 = vrsqrt.pop %v1527
          %v1554 = vmul.f32 %v1553, %v1527
          %v1555 = vmul.f32 %v1554, %v1553
          %v1556 = vmul.f32 0.5, %v1555
          %v1557 = vsub.f32 1.5, %v1556
          %v1558 = vmul.f32 %v1553, %v1557
          %vm1559 = vweird.f32 %v1527
          %vm1560 = vweird.f32 %v1553
          %vm1561 = vmor %vm1559, %vm1560
          %v1562 = vsel %vm1561, %v1553, %v1558
          %v1563 = vrsqrt.pop %v1528
          %v1564 = vmul.f32 %v1563, %v1528
          %v1565 = vmul.f32 %v1564, %v1563
          %v1566 = vmul.f32 0.5, %v1565
          %v1567 = vsub.f32 1.5, %v1566
          %v1568 = vmul.f32 %v1563, %v1567
          %vm1569 = vweird.f32 %v1528
          %vm1570 = vweird.f32 %v1563
          %vm1571 = vmor %vm1569, %vm1570
          %v1572 = vsel %vm1571, %v1563, %v1568
          %v1573 = vrsqrt.pop %v1529
          %v1574 = vmul.f32 %v1573, %v1529
          %v1575 = vmul.f32 %v1574, %v1573
          %v1576 = vmul.f32 0.5, %v1575
          %v1577 = vsub.f32 1.5, %v1576
          %v1578 = vmul.f32 %v1573, %v1577
          %vm1579 = vweird.f32 %v1529
          %vm1580 = vweird.f32 %v1573
          %vm1581 = vmor %vm1579, %vm1580
          %v1582 = vsel %vm1581, %v1573, %v1578
          %v1583 = vrsqrt.pop %v1530
          %v1584 = vmul.f32 %v1583, %v1530
          %v1585 = vmul.f32 %v1584, %v1583
          %v1586 = vmul.f32 0.5, %v1585
          %v1587 = vsub.f32 1.5, %v1586
          %v1588 = vmul.f32 %v1583, %v1587
          %vm1589 = vweird.f32 %v1530
          %vm1590 = vweird.f32 %v1583
          %vm1591 = vmor %vm1589, %vm1590
          %v1592 = vsel %vm1591, %v1583, %v1588
          %v1593 = vrsqrt.pop %v1531
          %v1594 = vmul.f32 %v1593, %v1531
          %v1595 = vmul.f32 %v1594, %v1593
          %v1596 = vmul.f32 0.5, %v1595
          %v1597 = vsub.f32 1.5, %v1596
          %v1598 = vmul.f32 %v1593, %v1597
          %vm1599 = vweird.f32 %v1531
          %vm1600 = vweird.f32 %v1593
          %vm1601 = vmor %vm1599, %vm1600
          %v1602 = vsel %vm1601, %v1593, %v1598
          %v1603 = vrsqrt.pop %v1532
          %v1604 = vmul.f32 %v1603, %v1532
          %v1605 = vmul.f32 %v1604, %v1603
          %v1606 = vmul.f32 0.5, %v1605
          %v1607 = vsub.f32 1.5, %v1606
          %v1608 = vmul.f32 %v1603, %v1607
          %vm1609 = vweird.f32 %v1532
          %vm1610 = vweird.f32 %v1603
          %vm1611 = vmor %vm1609, %vm1610
          %v1612 = vsel %vm1611, %v1603, %v1608
          %v1613 = vmul.f32 %v1365, %v1542
          %v1614 = vmul.f32 %v1366, %v1552
          %v1615 = vmul.f32 %v1367, %v1562
          %v1616 = vmul.f32 %v1368, %v1572
          %v1617 = vmul.f32 %v1369, %v1582
          %v1618 = vmul.f32 %v1370, %v1592
          %v1619 = vmul.f32 %v1371, %v1602
          %v1620 = vmul.f32 %v1372, %v1612
          %v1629 = vperm.slane %v1493, 0
          %v1630 = vperm.slane %v1494, 0
          %v1631 = vperm.slane %v1495, 0
          %v1632 = vperm.slane %v1496, 0
          %v1633 = vperm.slane %v1497, 0
          %v1634 = vperm.slane %v1498, 0
          %v1635 = vperm.slane %v1499, 0
          %v1636 = vperm.slane %v1500, 0
          %v1645 = vmul.f32 %v1629, %v1613
          %v1646 = vmul.f32 %v1630, %v1614
          %v1647 = vmul.f32 %v1631, %v1615
          %v1648 = vmul.f32 %v1632, %v1616
          %v1649 = vmul.f32 %v1633, %v1617
          %v1650 = vmul.f32 %v1634, %v1618
          %v1651 = vmul.f32 %v1635, %v1619
          %v1652 = vmul.f32 %v1636, %v1620
          %1653 = vadd.xlane.f32.xlu0 %v1645
          %v1654 = vpop.xlane.xlu0 %1653
          %1655 = vadd.xlane.f32.xlu0 %v1646
          %v1656 = vpop.xlane.xlu0 %1655
          %1657 = vadd.xlane.f32.xlu0 %v1647
          %v1658 = vpop.xlane.xlu0 %1657
          %1659 = vadd.xlane.f32.xlu0 %v1648
          %v1660 = vpop.xlane.xlu0 %1659
          %1661 = vadd.xlane.f32.xlu0 %v1649
          %v1662 = vpop.xlane.xlu0 %1661
          %1663 = vadd.xlane.f32.xlu0 %v1650
          %v1664 = vpop.xlane.xlu0 %1663
          %1665 = vadd.xlane.f32.xlu0 %v1651
          %v1666 = vpop.xlane.xlu0 %1665
          %1667 = vadd.xlane.f32.xlu0 %v1652
          %v1668 = vpop.xlane.xlu0 %1667
          %v1677 = vperm.slane %v1654, %v1313
          %v1678 = vperm.slane %v1656, %v1313
          %v1679 = vperm.slane %v1658, %v1313
          %v1680 = vperm.slane %v1660, %v1313
          %v1681 = vperm.slane %v1662, %v1313
          %v1682 = vperm.slane %v1664, %v1313
          %v1683 = vperm.slane %v1666, %v1313
          %v1684 = vperm.slane %v1668, %v1313
          %v1685 = vsel %vm1322, %v1678, %v1677
          %v1686 = vsel %vm1324, %v1679, %v1685
          %v1687 = vsel %vm1326, %v1680, %v1686
          %v1688 = vsel %vm1328, %v1681, %v1687
          %v1689 = vsel %vm1330, %v1682, %v1688
          %v1690 = vsel %vm1332, %v1683, %v1689
          %v1691 = vsel %vm1334, %v1684, %v1690
          %v1693 = vsel %vm1337, %v1691, 0.0
          %1694 = vadd.xlane.f32.xlu0 %v1693
          %v1695 = vpop.xlane.xlu0 %1694
          %v1696 = vadd.f32 %v935, %v936
          %v1697 = vadd.f32 %v946, %v961
          %v1698 = vadd.f32 %v947, %v962
          %v1699 = vadd.f32 %v948, %v963
          %v1700 = vadd.f32 %v949, %v964
          %v1701 = vadd.f32 %v950, %v965
          %v1702 = vadd.f32 %v951, %v966
          %v1703 = vadd.f32 %v952, %v967
          %v1704 = vmul.f32 %v1696, 0.5
          %v1705 = vmul.f32 %v1697, 0.5
          %v1706 = vmul.f32 %v1698, 0.5
          %v1707 = vmul.f32 %v1699, 0.5
          %v1708 = vmul.f32 %v1700, 0.5
          %v1709 = vmul.f32 %v1701, 0.5
          %v1710 = vmul.f32 %v1702, 0.5
          %v1711 = vmul.f32 %v1703, 0.5
          %v1712 = vmul.f32 %v937, %v937
          %v1713 = vmul.f32 %v938, %v938
          %v1714 = vmul.f32 %v939, %v939
          %v1715 = vmul.f32 %v940, %v940
          %v1716 = vmul.f32 %v941, %v941
          %v1717 = vmul.f32 %v942, %v942
          %v1718 = vmul.f32 %v943, %v943
          %v1719 = vmul.f32 %v944, %v944
          %1720 = vadd.xlane.f32.xlu0 %v1712
          %v1721 = vpop.xlane.xlu0 %1720
          %1722 = vadd.xlane.f32.xlu0 %v1713
          %v1723 = vpop.xlane.xlu0 %1722
          %1724 = vadd.xlane.f32.xlu0 %v1714
          %v1725 = vpop.xlane.xlu0 %1724
          %1726 = vadd.xlane.f32.xlu0 %v1715
          %v1727 = vpop.xlane.xlu0 %1726
          %1728 = vadd.xlane.f32.xlu0 %v1716
          %v1729 = vpop.xlane.xlu0 %1728
          %1730 = vadd.xlane.f32.xlu0 %v1717
          %v1731 = vpop.xlane.xlu0 %1730
          %1732 = vadd.xlane.f32.xlu0 %v1718
          %v1733 = vpop.xlane.xlu0 %1732
          %1734 = vadd.xlane.f32.xlu0 %v1719
          %v1735 = vpop.xlane.xlu0 %1734
          %v1736 = vadd.f32 %v1721, 1e-12
          %v1737 = vadd.f32 %v1723, 1e-12
          %v1738 = vadd.f32 %v1725, 1e-12
          %v1739 = vadd.f32 %v1727, 1e-12
          %v1740 = vadd.f32 %v1729, 1e-12
          %v1741 = vadd.f32 %v1731, 1e-12
          %v1742 = vadd.f32 %v1733, 1e-12
          %v1743 = vadd.f32 %v1735, 1e-12
          %v1744 = vrsqrt.pop %v1736
          %v1745 = vmul.f32 %v1744, %v1736
          %v1746 = vmul.f32 %v1745, %v1744
          %v1747 = vmul.f32 0.5, %v1746
          %v1748 = vsub.f32 1.5, %v1747
          %v1749 = vmul.f32 %v1744, %v1748
          %vm1750 = vweird.f32 %v1736
          %vm1751 = vweird.f32 %v1744
          %vm1752 = vmor %vm1750, %vm1751
          %v1753 = vsel %vm1752, %v1744, %v1749
          %v1754 = vrsqrt.pop %v1737
          %v1755 = vmul.f32 %v1754, %v1737
          %v1756 = vmul.f32 %v1755, %v1754
          %v1757 = vmul.f32 0.5, %v1756
          %v1758 = vsub.f32 1.5, %v1757
          %v1759 = vmul.f32 %v1754, %v1758
          %vm1760 = vweird.f32 %v1737
          %vm1761 = vweird.f32 %v1754
          %vm1762 = vmor %vm1760, %vm1761
          %v1763 = vsel %vm1762, %v1754, %v1759
          %v1764 = vrsqrt.pop %v1738
          %v1765 = vmul.f32 %v1764, %v1738
          %v1766 = vmul.f32 %v1765, %v1764
          %v1767 = vmul.f32 0.5, %v1766
          %v1768 = vsub.f32 1.5, %v1767
          %v1769 = vmul.f32 %v1764, %v1768
          %vm1770 = vweird.f32 %v1738
          %vm1771 = vweird.f32 %v1764
          %vm1772 = vmor %vm1770, %vm1771
          %v1773 = vsel %vm1772, %v1764, %v1769
          %v1774 = vrsqrt.pop %v1739
          %v1775 = vmul.f32 %v1774, %v1739
          %v1776 = vmul.f32 %v1775, %v1774
          %v1777 = vmul.f32 0.5, %v1776
          %v1778 = vsub.f32 1.5, %v1777
          %v1779 = vmul.f32 %v1774, %v1778
          %vm1780 = vweird.f32 %v1739
          %vm1781 = vweird.f32 %v1774
          %vm1782 = vmor %vm1780, %vm1781
          %v1783 = vsel %vm1782, %v1774, %v1779
          %v1784 = vrsqrt.pop %v1740
          %v1785 = vmul.f32 %v1784, %v1740
          %v1786 = vmul.f32 %v1785, %v1784
          %v1787 = vmul.f32 0.5, %v1786
          %v1788 = vsub.f32 1.5, %v1787
          %v1789 = vmul.f32 %v1784, %v1788
          %vm1790 = vweird.f32 %v1740
          %vm1791 = vweird.f32 %v1784
          %vm1792 = vmor %vm1790, %vm1791
          %v1793 = vsel %vm1792, %v1784, %v1789
          %v1794 = vrsqrt.pop %v1741
          %v1795 = vmul.f32 %v1794, %v1741
          %v1796 = vmul.f32 %v1795, %v1794
          %v1797 = vmul.f32 0.5, %v1796
          %v1798 = vsub.f32 1.5, %v1797
          %v1799 = vmul.f32 %v1794, %v1798
          %vm1800 = vweird.f32 %v1741
          %vm1801 = vweird.f32 %v1794
          %vm1802 = vmor %vm1800, %vm1801
          %v1803 = vsel %vm1802, %v1794, %v1799
          %v1804 = vrsqrt.pop %v1742
          %v1805 = vmul.f32 %v1804, %v1742
          %v1806 = vmul.f32 %v1805, %v1804
          %v1807 = vmul.f32 0.5, %v1806
          %v1808 = vsub.f32 1.5, %v1807
          %v1809 = vmul.f32 %v1804, %v1808
          %vm1810 = vweird.f32 %v1742
          %vm1811 = vweird.f32 %v1804
          %vm1812 = vmor %vm1810, %vm1811
          %v1813 = vsel %vm1812, %v1804, %v1809
          %v1814 = vrsqrt.pop %v1743
          %v1815 = vmul.f32 %v1814, %v1743
          %v1816 = vmul.f32 %v1815, %v1814
          %v1817 = vmul.f32 0.5, %v1816
          %v1818 = vsub.f32 1.5, %v1817
          %v1819 = vmul.f32 %v1814, %v1818
          %vm1820 = vweird.f32 %v1743
          %vm1821 = vweird.f32 %v1814
          %vm1822 = vmor %vm1820, %vm1821
          %v1823 = vsel %vm1822, %v1814, %v1819
          %v1824 = vmul.f32 %v937, %v1753
          %v1825 = vmul.f32 %v938, %v1763
          %v1826 = vmul.f32 %v939, %v1773
          %v1827 = vmul.f32 %v940, %v1783
          %v1828 = vmul.f32 %v941, %v1793
          %v1829 = vmul.f32 %v942, %v1803
          %v1830 = vmul.f32 %v943, %v1813
          %v1831 = vmul.f32 %v944, %v1823
          %v1832 = vmul.f32 %v1704, %v1704
          %v1833 = vmul.f32 %v1705, %v1705
          %v1834 = vmul.f32 %v1706, %v1706
          %v1835 = vmul.f32 %v1707, %v1707
          %v1836 = vmul.f32 %v1708, %v1708
          %v1837 = vmul.f32 %v1709, %v1709
          %v1838 = vmul.f32 %v1710, %v1710
          %v1839 = vmul.f32 %v1711, %v1711
          %v1840 = vsel %vm1015, %v1832, 0.0
          %1841 = vadd.xlane.f32.xlu0 %v1840
          %v1842 = vpop.xlane.xlu0 %1841
          %v1843 = vsel %vm1015, %v1833, 0.0
          %1844 = vadd.xlane.f32.xlu0 %v1843
          %v1845 = vpop.xlane.xlu0 %1844
          %v1846 = vsel %vm1015, %v1834, 0.0
          %1847 = vadd.xlane.f32.xlu0 %v1846
          %v1848 = vpop.xlane.xlu0 %1847
          %v1849 = vsel %vm1015, %v1835, 0.0
          %1850 = vadd.xlane.f32.xlu0 %v1849
          %v1851 = vpop.xlane.xlu0 %1850
          %v1852 = vsel %vm1015, %v1836, 0.0
          %1853 = vadd.xlane.f32.xlu0 %v1852
          %v1854 = vpop.xlane.xlu0 %1853
          %v1855 = vsel %vm1015, %v1837, 0.0
          %1856 = vadd.xlane.f32.xlu0 %v1855
          %v1857 = vpop.xlane.xlu0 %1856
          %v1858 = vsel %vm1015, %v1838, 0.0
          %1859 = vadd.xlane.f32.xlu0 %v1858
          %v1860 = vpop.xlane.xlu0 %1859
          %v1861 = vsel %vm1015, %v1839, 0.0
          %1862 = vadd.xlane.f32.xlu0 %v1861
          %v1863 = vpop.xlane.xlu0 %1862
          %v1864 = vadd.f32 %v1842, 1e-12
          %v1865 = vadd.f32 %v1845, 1e-12
          %v1866 = vadd.f32 %v1848, 1e-12
          %v1867 = vadd.f32 %v1851, 1e-12
          %v1868 = vadd.f32 %v1854, 1e-12
          %v1869 = vadd.f32 %v1857, 1e-12
          %v1870 = vadd.f32 %v1860, 1e-12
          %v1871 = vadd.f32 %v1863, 1e-12
          %v1872 = vrsqrt.pop %v1864
          %v1873 = vmul.f32 %v1872, %v1864
          %v1874 = vmul.f32 %v1873, %v1872
          %v1875 = vmul.f32 0.5, %v1874
          %v1876 = vsub.f32 1.5, %v1875
          %v1877 = vmul.f32 %v1872, %v1876
          %vm1878 = vweird.f32 %v1864
          %vm1879 = vweird.f32 %v1872
          %vm1880 = vmor %vm1878, %vm1879
          %v1881 = vsel %vm1880, %v1872, %v1877
          %v1882 = vrsqrt.pop %v1865
          %v1883 = vmul.f32 %v1882, %v1865
          %v1884 = vmul.f32 %v1883, %v1882
          %v1885 = vmul.f32 0.5, %v1884
          %v1886 = vsub.f32 1.5, %v1885
          %v1887 = vmul.f32 %v1882, %v1886
          %vm1888 = vweird.f32 %v1865
          %vm1889 = vweird.f32 %v1882
          %vm1890 = vmor %vm1888, %vm1889
          %v1891 = vsel %vm1890, %v1882, %v1887
          %v1892 = vrsqrt.pop %v1866
          %v1893 = vmul.f32 %v1892, %v1866
          %v1894 = vmul.f32 %v1893, %v1892
          %v1895 = vmul.f32 0.5, %v1894
          %v1896 = vsub.f32 1.5, %v1895
          %v1897 = vmul.f32 %v1892, %v1896
          %vm1898 = vweird.f32 %v1866
          %vm1899 = vweird.f32 %v1892
          %vm1900 = vmor %vm1898, %vm1899
          %v1901 = vsel %vm1900, %v1892, %v1897
          %v1902 = vrsqrt.pop %v1867
          %v1903 = vmul.f32 %v1902, %v1867
          %v1904 = vmul.f32 %v1903, %v1902
          %v1905 = vmul.f32 0.5, %v1904
          %v1906 = vsub.f32 1.5, %v1905
          %v1907 = vmul.f32 %v1902, %v1906
          %vm1908 = vweird.f32 %v1867
          %vm1909 = vweird.f32 %v1902
          %vm1910 = vmor %vm1908, %vm1909
          %v1911 = vsel %vm1910, %v1902, %v1907
          %v1912 = vrsqrt.pop %v1868
          %v1913 = vmul.f32 %v1912, %v1868
          %v1914 = vmul.f32 %v1913, %v1912
          %v1915 = vmul.f32 0.5, %v1914
          %v1916 = vsub.f32 1.5, %v1915
          %v1917 = vmul.f32 %v1912, %v1916
          %vm1918 = vweird.f32 %v1868
          %vm1919 = vweird.f32 %v1912
          %vm1920 = vmor %vm1918, %vm1919
          %v1921 = vsel %vm1920, %v1912, %v1917
          %v1922 = vrsqrt.pop %v1869
          %v1923 = vmul.f32 %v1922, %v1869
          %v1924 = vmul.f32 %v1923, %v1922
          %v1925 = vmul.f32 0.5, %v1924
          %v1926 = vsub.f32 1.5, %v1925
          %v1927 = vmul.f32 %v1922, %v1926
          %vm1928 = vweird.f32 %v1869
          %vm1929 = vweird.f32 %v1922
          %vm1930 = vmor %vm1928, %vm1929
          %v1931 = vsel %vm1930, %v1922, %v1927
          %v1932 = vrsqrt.pop %v1870
          %v1933 = vmul.f32 %v1932, %v1870
          %v1934 = vmul.f32 %v1933, %v1932
          %v1935 = vmul.f32 0.5, %v1934
          %v1936 = vsub.f32 1.5, %v1935
          %v1937 = vmul.f32 %v1932, %v1936
          %vm1938 = vweird.f32 %v1870
          %vm1939 = vweird.f32 %v1932
          %vm1940 = vmor %vm1938, %vm1939
          %v1941 = vsel %vm1940, %v1932, %v1937
          %v1942 = vrsqrt.pop %v1871
          %v1943 = vmul.f32 %v1942, %v1871
          %v1944 = vmul.f32 %v1943, %v1942
          %v1945 = vmul.f32 0.5, %v1944
          %v1946 = vsub.f32 1.5, %v1945
          %v1947 = vmul.f32 %v1942, %v1946
          %vm1948 = vweird.f32 %v1871
          %vm1949 = vweird.f32 %v1942
          %vm1950 = vmor %vm1948, %vm1949
          %v1951 = vsel %vm1950, %v1942, %v1947
          %v1952 = vmul.f32 %v1704, %v1881
          %v1953 = vmul.f32 %v1705, %v1891
          %v1954 = vmul.f32 %v1706, %v1901
          %v1955 = vmul.f32 %v1707, %v1911
          %v1956 = vmul.f32 %v1708, %v1921
          %v1957 = vmul.f32 %v1709, %v1931
          %v1958 = vmul.f32 %v1710, %v1941
          %v1959 = vmul.f32 %v1711, %v1951
          %v1968 = vperm.slane %v1952, 0
          %v1969 = vperm.slane %v1953, 0
          %v1970 = vperm.slane %v1954, 0
          %v1971 = vperm.slane %v1955, 0
          %v1972 = vperm.slane %v1956, 0
          %v1973 = vperm.slane %v1957, 0
          %v1974 = vperm.slane %v1958, 0
          %v1975 = vperm.slane %v1959, 0
          %v1984 = vmul.f32 %v1824, %v1968
          %v1985 = vmul.f32 %v1825, %v1969
          %v1986 = vmul.f32 %v1826, %v1970
          %v1987 = vmul.f32 %v1827, %v1971
          %v1988 = vmul.f32 %v1828, %v1972
          %v1989 = vmul.f32 %v1829, %v1973
          %v1990 = vmul.f32 %v1830, %v1974
          %v1991 = vmul.f32 %v1831, %v1975
          %1992 = vadd.xlane.f32.xlu0 %v1984
          %v1993 = vpop.xlane.xlu0 %1992
          %1994 = vadd.xlane.f32.xlu0 %v1985
          %v1995 = vpop.xlane.xlu0 %1994
          %1996 = vadd.xlane.f32.xlu0 %v1986
          %v1997 = vpop.xlane.xlu0 %1996
          %1998 = vadd.xlane.f32.xlu0 %v1987
          %v1999 = vpop.xlane.xlu0 %1998
          %2000 = vadd.xlane.f32.xlu0 %v1988
          %v2001 = vpop.xlane.xlu0 %2000
          %2002 = vadd.xlane.f32.xlu0 %v1989
          %v2003 = vpop.xlane.xlu0 %2002
          %2004 = vadd.xlane.f32.xlu0 %v1990
          %v2005 = vpop.xlane.xlu0 %2004
          %2006 = vadd.xlane.f32.xlu0 %v1991
          %v2007 = vpop.xlane.xlu0 %2006
          %v2016 = vperm.slane %v1993, %v1313
          %v2017 = vperm.slane %v1995, %v1313
          %v2018 = vperm.slane %v1997, %v1313
          %v2019 = vperm.slane %v1999, %v1313
          %v2020 = vperm.slane %v2001, %v1313
          %v2021 = vperm.slane %v2003, %v1313
          %v2022 = vperm.slane %v2005, %v1313
          %v2023 = vperm.slane %v2007, %v1313
          %v2024 = vsel %vm1322, %v2017, %v2016
          %v2025 = vsel %vm1324, %v2018, %v2024
          %v2026 = vsel %vm1326, %v2019, %v2025
          %v2027 = vsel %vm1328, %v2020, %v2026
          %v2028 = vsel %vm1330, %v2021, %v2027
          %v2029 = vsel %vm1332, %v2022, %v2028
          %v2030 = vsel %vm1334, %v2023, %v2029
          %v2032 = vsel %vm1337, %v2030, 0.0
          %2033 = vadd.xlane.f32.xlu0 %v2032
          %v2034 = vpop.xlane.xlu0 %2033
          %v2035 = vadd.f32 %v1340, %v1695
          %v2036 = vadd.f32 %v2035, %v2034
          %2037 = vst [vmem:[%s341] sm:$0xff] %v2036
        $region56: #{tpu_custom_call.1} parent=39 // pred_fallthru
          _
        %s2038 = sand.u32 %s183, 1
        %s2039 = scalar_lea.sflag [#allocation6], %s2038
        %s2040 = sand.u32 %s183, 1
        %s2041 = smul.addr %s2040, 8
        %s2042 = scalar_lea.vmem [#allocation7], %s2041
        // Predicated region
        $region57: #{tpu_custom_call.1} parent=39 // pred_check
          %p2043 = pneg %p193
        $region58: #{tpu_custom_call.1} parent=39 // pred_check_branch
          %2045 = sbr.rel (%p2043) target = $region60
        $region59: #{tpu_custom_call.1} parent=39 // pred_region
          %2047 = vsyncadd %s2039, 0
          %s2048 = smul.addr %s27, 8
          %s2049 = scalar_lea.hbm %s5, %s2048
          %s2051 = sshll.u32 %s2042, 4
          %s2052 = int_to_ptr.vmem [resolvable:$true] %s2051
          %s2053 = sshll.u32 %s2049, 4
          %s2054 = int_to_ptr.hbm [resolvable:$true] %s2053
          %2056 = dma.vmem_to_hbm [thread:$0]  %s2052, 128, %s2054, %s2039
        $region60: #{tpu_custom_call.1} parent=39 // pred_fallthru
          _
      $region40: #{tpu_custom_call.1} parent=5 // pred_fallthru
        _
      %p2057 = scmp.le.s32.totalorder 2, %s17
      // Predicated region
      $region61: #{tpu_custom_call.1} parent=5 // pred_check
        %p2058 = pneg %p2057
      $region62: #{tpu_custom_call.1} parent=5 // pred_check_branch
        %2060 = sbr.rel (%p2058) target = $region64
      $region63: #{tpu_custom_call.1} parent=5 // pred_region
        %s2061 = ssub.s32 %s17, 2
        // Predicated region
        $region65: #{tpu_custom_call.1} parent=63 // pred_check
          %p2062 = pneg %p199
        $region66: #{tpu_custom_call.1} parent=63 // pred_check_branch
          %2064 = sbr.rel (%p2062) target = $region68
        $region67: #{tpu_custom_call.1} parent=63 // pred_region
          %s2065 = sand.u32 %s184, 1
          %s2066 = scalar_lea.sflag [#allocation6], %s2065
          %s2067 = sand.u32 %s184, 1
          %s2068 = smul.addr %s2067, 8
          %s2069 = scalar_lea.vmem [#allocation7], %s2068
          %2071 = dma.done %s2066, 128
        $region68: #{tpu_custom_call.1} parent=63 // pred_fallthru
          _
      $region64: #{tpu_custom_call.1} parent=5 // pred_fallthru
        _
    $region6: #{tpu_custom_call.1} parent=1 // loop_footer
      %s21 = sadd.s32 1, %s17
    $region7: #{tpu_custom_call.1} parent=1 // loop_footer_branch
      %16 = sbr.rel target = $region3
    $region8: #{tpu_custom_call.1} parent=1 // loop_exit
      _
    %2072 = vsyncpa [#allocation5], 1
    %s2073 = scalar_lea.sflag [#allocation5], 1
    %2074 = vsyncpa %s2073, 1
    %2075 = vsyncpa [#allocation6], 1
    %s2076 = scalar_lea.sflag [#allocation6], 1
    %2077 = vsyncpa %s2076, 1

</llo_original>
